<compile_context>
chip_gen: v7x
topology: tpu7x:2x2x1
jax: 0.10.0
libtpu: 0.0.40
codegen_flags: <defaults>
</compile_context>

<pallas_src>
import functools
import math

import jax
import jax.numpy as jnp
from jax.experimental import pallas as pl
from jax.experimental.pallas import tpu as pltpu

D_MODEL = 32        # d_model (C)
ORDER = 3           # 'approximation' -> Chebyshev order 3 (4 coefficients)
KSIZE = 5           # depthwise conv kernel size, padding = KSIZE // 2
EPS = 1e-5
LANES = 128         # TPU lane width


def _cdiv(a, b):
    return -(-a // b)


def _wavelet_kernel(x_ref, cheb_ref, conv_ref, gsum_ref, vec_ref, o_ref, *, channels, t4):
    """One (r4, 128) slab: `pack` consecutive timesteps x `channels` per 128-lane row."""
    xf = x_ref[...].astype(jnp.float32)            # (r4, 128)
    r4 = xf.shape[0]

    # ---- depthwise Conv1d(k=5, pad=2, groups=C): banded block-diagonal MXU dots ----
    xb = xf.astype(jnp.bfloat16)
    acc = jnp.dot(xb, conv_ref[0], preferred_element_type=jnp.float32)       # intra-row taps
    if t4 > 1:
        # Per-row sequence-edge masks (every block starts on a sequence boundary, and
        # r4 is a multiple of t4, so the local row index mod t4 equals the global one).
        rmod = jax.lax.broadcasted_iota(jnp.int32, (r4, 1), 0) % t4
        not_first = (rmod != 0).astype(jnp.float32)        # row is not the first of its sequence
        not_last = (rmod != t4 - 1).astype(jnp.float32)    # row is not the last of its sequence
        z_prev = jnp.dot(xb, conv_ref[1], preferred_element_type=jnp.float32)
        z_next = jnp.dot(xb, conv_ref[2], preferred_element_type=jnp.float32)
        # contribution to row r comes from rows r-1 / r+1 -> roll the f32 dot results.
        acc += not_first * pltpu.roll(z_prev, shift=1, axis=0)
        acc += not_last * pltpu.roll(z_next, shift=r4 - 1, axis=0)

    # ---- ChebyKAN: y = sum_d T_d(tanh x) @ W_d (degree-0 term folded into the bias) ----
    t = jnp.tanh(xf)
    t2 = 2.0 * t * t - 1.0                    # T2 closed form (no ones-like T0 temp)
    t3 = t * (2.0 * t2 - 1.0)                 # T3 = 2*t*T2 - T1
    acc += jnp.dot(t.astype(jnp.bfloat16), cheb_ref[0], preferred_element_type=jnp.float32)
    acc += jnp.dot(t2.astype(jnp.bfloat16), cheb_ref[1], preferred_element_type=jnp.float32)
    acc += jnp.dot(t3.astype(jnp.bfloat16), cheb_ref[2], preferred_element_type=jnp.float32)

    # ---- residual + fused per-channel bias + LayerNorm (group sums on the MXU) ----
    # TODO(synk): nn.Dropout(0.1) omitted (eval/inference semantics -> identity).
    vecs = vec_ref[...]                        # (3, 128): [bias, gamma, beta]
    h = xf + acc + vecs[0:1]
    inv_c = 1.0 / channels
    hp = jax.lax.Precision.HIGHEST             # f32 operands -> LN statistics stay near-exact
    g = gsum_ref[...]
    mean = jnp.dot(h, g, preferred_element_type=jnp.float32, precision=hp) * inv_c
    d = h - mean
    var = jnp.dot(d * d, g, preferred_element_type=jnp.float32, precision=hp) * inv_c
    out = d * jax.lax.rsqrt(var + EPS) * vecs[1:2] + vecs[2:3]
    o_ref[...] = out.astype(o_ref.dtype)


def wavelet_component_processor(x, cheb_w, conv_w, conv_b, gamma, beta):
    """x: (B, T, C). cheb_w: (ORDER+1, C, C). conv_w: (KSIZE, C) (PyTorch (C,1,K) transposed).
    conv_b / gamma / beta: (1, C)."""
    B, T, C = x.shape
    assert LANES % C == 0, "d_model must divide 128 for the lane-dense packing"
    pack = LANES // C
    pad = KSIZE // 2
    assert pack >= pad, "conv halo must stay within the adjacent packed row"
    assert T % pack == 0, "T must be a multiple of the packing factor (sequence-aligned rows)"
    T4 = T // pack                        # packed rows per sequence
    N = B * T
    n4 = N // pack                        # total packed rows
    f32 = jnp.float32

    # ---- block sizing: whole sequences per block, sublane-aligned, >=2 blocks when possible ----
    row_align = (8 * T4) // math.gcd(8, T4)               # lcm(8, T4)
    target_r4 = 2048                                       # ~8192 flattened positions per grid step
    if n4 <= row_align:
        r4_blk = row_align
    else:
        cap = max(row_align, (target_r4 // row_align) * row_align)
        half = row_align * _cdiv(_cdiv(n4, 2), row_align)  # aligned size that still yields >=2 blocks
        r4_blk = min(cap, half)
    n4_pad = _cdiv(n4, r4_blk) * r4_blk
    grid = (n4_pad // r4_blk,)

    # ---- wrapper-side layout plumbing (one-off, free relative to the kernel) ----
    x_p = x.reshape(n4, LANES)                             # pack timesteps per 128-lane row
    if n4_pad != n4:
        x_p = jnp.pad(x_p, ((0, n4_pad - n4), (0, 0)))     # zero rows: no unspecified-memory reads

    eye_p = jnp.eye(pack, dtype=f32)
    # Chebyshev degrees 1..ORDER as block-diagonal (128,128) bf16 MXU weights; degree 0 -> bias.
    cheb_mats = jnp.stack(
        [jnp.kron(eye_p, cheb_w[d].astype(f32)) for d in range(1, ORDER + 1)]
    ).astype(jnp.bfloat16)

    # Depthwise conv as banded block-diagonal matrices: intra-row, prev-row, next-row taps.
    eye_c = jnp.eye(C, dtype=f32)
    gi = jnp.arange(pack)
    offm = gi[:, None] - gi[None, :]                       # input packed pos - output packed pos

    def band(shift):
        offd = offm + shift
        valid = ((offd >= -pad) & (offd <= pad)).astype(f32)
        kidx = jnp.clip(offd + pad, 0, KSIZE - 1)
        blocks = conv_w.astype(f32)[kidx] * valid[..., None]      # (pack, pack, C)
        m = blocks[:, :, :, None] * eye_c[None, None]             # (p_in, p_out, C_in, C_out)
        return m.transpose(0, 2, 1, 3).reshape(LANES, LANES)

    conv_mats = jnp.stack([band(0), band(-pack), band(pack)]).astype(jnp.bfloat16)

    # LayerNorm group-sum matrix (exact 0/1 entries; used with f32 operands on the MXU).
    gsum = jnp.kron(eye_p, jnp.ones((C, C), dtype=f32))

    # Fused constant vectors: [chebyshev degree-0 + conv bias, gamma, beta], tiled to 128 lanes.
    bias_c = cheb_w[0].astype(f32).sum(axis=0) + conv_b.astype(f32).reshape(C)
    vecs = jnp.stack([jnp.tile(bias_c, pack),
                      jnp.tile(gamma.astype(f32).reshape(C), pack),
                      jnp.tile(beta.astype(f32).reshape(C), pack)])

    kernel = functools.partial(_wavelet_kernel, channels=C, t4=T4)
    out_p = pl.pallas_call(
        kernel,
        out_shape=jax.ShapeDtypeStruct((n4_pad, LANES), x.dtype),
        grid_spec=pltpu.PrefetchScalarGridSpec(
            num_scalar_prefetch=0,
            grid=grid,
            in_specs=[
                pl.BlockSpec((r4_blk, LANES), lambda i: (i, 0)),            # packed activations
                pl.BlockSpec((ORDER, LANES, LANES), lambda i: (0, 0, 0)),   # block-diag cheb W1..W3 (bf16)
                pl.BlockSpec((3, LANES, LANES), lambda i: (0, 0, 0)),       # conv band matrices (bf16)
                pl.BlockSpec((LANES, LANES), lambda i: (0, 0)),             # LN group-sum matrix (f32)
                pl.BlockSpec((3, LANES), lambda i: (0, 0)),                 # [bias, gamma, beta]
            ],
            out_specs=pl.BlockSpec((r4_blk, LANES), lambda i: (i, 0)),
        ),
        compiler_params=pltpu.CompilerParams(
            dimension_semantics=("parallel",),
            vmem_limit_bytes=32 * 1024 * 1024,
        ),
    )(x_p, cheb_mats, conv_mats, gsum, vecs)
    return out_p[:n4].reshape(B, T, C)


def reference(x, cheb_w, conv_w, conv_b, gamma, beta):
    """Pure-JAX reference mirroring the PyTorch forward (eval mode), f32 HIGHEST precision."""
    B, T, C = x.shape
    hp = jax.lax.Precision.HIGHEST
    t = jnp.tanh(x)
    polys = [jnp.ones_like(t), t]
    for _ in range(2, ORDER + 1):
        polys.append(2.0 * t * polys[-1] - polys[-2])
    y_kan = sum(jnp.einsum('btc,cd->btd', polys[d], cheb_w[d], precision=hp)
                for d in range(ORDER + 1))

    pad = KSIZE // 2
    xpad = jnp.pad(x, ((0, 0), (pad, pad), (0, 0)))
    y_conv = sum(xpad[:, k:k + T, :] * conv_w[k][None, None, :] for k in range(KSIZE))
    y_conv = y_conv + conv_b[0][None, None, :]

    h = x + y_kan + y_conv
    mu = jnp.mean(h, axis=-1, keepdims=True)
    var = jnp.mean((h - mu) ** 2, axis=-1, keepdims=True)
    return (h - mu) / jnp.sqrt(var + EPS) * gamma[0] + beta[0]


if __name__ == "__main__":
    B, T, C = 2, 16, D_MODEL
    key = jax.random.PRNGKey(0)
    kx, kc, kw, kb = jax.random.split(key, 4)

    x = jax.random.normal(kx, (B, T, C), dtype=jnp.float32)

    # ChebyKANLinear coefficients: normal(0, 1/(in_dim*(order+1))), laid out as (order+1, C_in, C_out)
    cheb_w = jax.random.normal(kc, (ORDER + 1, C, C), dtype=jnp.float32) / (C * (ORDER + 1))
    # Depthwise conv: PyTorch weight (C,1,K) stored here as (K, C); bias (C,) stored as (1, C)
    conv_w = jax.random.normal(kw, (KSIZE, C), dtype=jnp.float32) * (1.0 / KSIZE)
    conv_b = jax.random.normal(kb, (1, C), dtype=jnp.float32) * 0.1
    # LayerNorm default init
    gamma = jnp.ones((1, C), dtype=jnp.float32)
    beta = jnp.zeros((1, C), dtype=jnp.float32)

    out = wavelet_component_processor(x, cheb_w, conv_w, conv_b, gamma, beta)
    out = jax.block_until_ready(out)

    ref = reference(x, cheb_w, conv_w, conv_b, gamma, beta)
    assert out.shape == (B, T, C)
    # KAN and depthwise-conv matmuls use bf16 MXU operands (f32 accumulation); LayerNorm
    # statistics use f32 operands at HIGHEST precision -> tolerance covers the bf16 rounding.
    assert jnp.allclose(out, ref, atol=5e-3, rtol=5e-3), "mismatch vs reference"
    print("KERNEL_OK")
</pallas_src>

<mosaic_0001>
module attributes {stable_mosaic.version = 11 : i64} {
  func.func @_wavelet_kernel(%arg0: i32, %arg1: memref<8x128xf32, #tpu.memory_space<vmem>>, %arg2: memref<3x128x128xbf16, #tpu.memory_space<vmem>>, %arg3: memref<3x128x128xbf16, #tpu.memory_space<vmem>>, %arg4: memref<128x128xf32, #tpu.memory_space<vmem>>, %arg5: memref<3x128xf32, #tpu.memory_space<vmem>>, %arg6: memref<8x128xf32, #tpu.memory_space<vmem>>) attributes {dimension_semantics = [#tpu.dimension_semantics<parallel>], iteration_bounds = array<i64: 1>, scalar_prefetch = 0 : i64, scratch_operands = 0 : i64, tpu.core_type = #tpu.core_type<tc>, window_params = [{transform_indices = @transform_0, window_bounds = array<i64: 8, 128>}, {pipeline_mode = #tpu.pipeline_mode<synchronous>, transform_indices = @transform_1, window_bounds = array<i64: 3, 128, 128>}, {pipeline_mode = #tpu.pipeline_mode<synchronous>, transform_indices = @transform_2, window_bounds = array<i64: 3, 128, 128>}, {pipeline_mode = #tpu.pipeline_mode<synchronous>, transform_indices = @transform_3, window_bounds = array<i64: 128, 128>}, {pipeline_mode = #tpu.pipeline_mode<synchronous>, transform_indices = @transform_4, window_bounds = array<i64: 3, 128>}, {transform_indices = @transform_5, window_bounds = array<i64: 8, 128>}]} {
    %c0 = arith.constant 0 : index
    %c0_0 = arith.constant 0 : index
    %0 = vector.load %arg1[%c0, %c0_0] : memref<8x128xf32, #tpu.memory_space<vmem>>, vector<8x128xf32>
    %1 = arith.truncf %0 : vector<8x128xf32> to vector<8x128xbf16>
    %c0_1 = arith.constant 0 : index
    %c0_2 = arith.constant 0 : index
    %c0_3 = arith.constant 0 : index
    %2 = vector.load %arg3[%c0_1, %c0_2, %c0_3] : memref<3x128x128xbf16, #tpu.memory_space<vmem>>, vector<1x128x128xbf16>
    %3 = vector.shape_cast %2 : vector<1x128x128xbf16> to vector<128x128xbf16>
    %cst = arith.constant dense<0.000000e+00> : vector<8x128xf32>
    %4 = tpu.matmul %1, %3, %cst {dimension_numbers = #tpu.dot_dimension_numbers<[1], [0], [0], [1], [0, 0, 1, 1], [], []>} : vector<8x128xbf16>, vector<128x128xbf16>, vector<8x128xf32> -> vector<8x128xf32>
    %5 = tpu.iota {dimensions = array<i32: 0>} : vector<8x1xi32>
    %c4_i32 = arith.constant 4 : i32
    %c0_i32 = arith.constant 0 : i32
    %6 = arith.cmpi eq, %c4_i32, %c0_i32 : i32
    %c1_i32 = arith.constant 1 : i32
    %7 = arith.select %6, %c1_i32, %c4_i32 : i32
    %8 = vector.broadcast %7 : i32 to vector<8x1xi32>
    %9 = arith.remsi %5, %8 : vector<8x1xi32>
    %c0_i32_4 = arith.constant 0 : i32
    %10 = vector.broadcast %c0_i32_4 : i32 to vector<8x1xi32>
    %11 = arith.cmpi ne, %9, %10 : vector<8x1xi32>
    %c0_i32_5 = arith.constant 0 : i32
    %12 = vector.broadcast %c0_i32_5 : i32 to vector<8x1xi32>
    %13 = arith.cmpi slt, %9, %12 : vector<8x1xi32>
    %c0_i32_6 = arith.constant 0 : i32
    %14 = arith.cmpi slt, %7, %c0_i32_6 : i32
    %15 = vector.broadcast %14 : i1 to vector<8x1xi1>
    %16 = vector.broadcast %15 : vector<8x1xi1> to vector<8x1xi1>
    %17 = arith.xori %13, %16 : vector<8x1xi1>
    %18 = arith.andi %17, %11 : vector<8x1xi1>
    %19 = vector.broadcast %7 : i32 to vector<8x1xi32>
    %20 = arith.addi %9, %19 : vector<8x1xi32>
    %21 = arith.select %18, %20, %9 : vector<8x1xi1>, vector<8x1xi32>
    %c0_i32_7 = arith.constant 0 : i32
    %22 = vector.broadcast %c0_i32_7 : i32 to vector<8x1xi32>
    %23 = arith.cmpi ne, %21, %22 : vector<8x1xi32>
    %24 = arith.extui %23 : vector<8x1xi1> to vector<8x1xi32>
    %25 = arith.sitofp %24 : vector<8x1xi32> to vector<8x1xf32>
    %c3_i32 = arith.constant 3 : i32
    %26 = vector.broadcast %c3_i32 : i32 to vector<8x1xi32>
    %27 = arith.cmpi ne, %21, %26 : vector<8x1xi32>
    %28 = arith.extui %27 : vector<8x1xi1> to vector<8x1xi32>
    %29 = arith.sitofp %28 : vector<8x1xi32> to vector<8x1xf32>
    %c1 = arith.constant 1 : index
    %c0_8 = arith.constant 0 : index
    %c0_9 = arith.constant 0 : index
    %30 = vector.load %arg3[%c1, %c0_8, %c0_9] : memref<3x128x128xbf16, #tpu.memory_space<vmem>>, vector<1x128x128xbf16>
    %31 = vector.shape_cast %30 : vector<1x128x128xbf16> to vector<128x128xbf16>
    %cst_10 = arith.constant dense<0.000000e+00> : vector<8x128xf32>
    %32 = tpu.matmul %1, %31, %cst_10 {dimension_numbers = #tpu.dot_dimension_numbers<[1], [0], [0], [1], [0, 0, 1, 1], [], []>} : vector<8x128xbf16>, vector<128x128xbf16>, vector<8x128xf32> -> vector<8x128xf32>
    %c2 = arith.constant 2 : index
    %c0_11 = arith.constant 0 : index
    %c0_12 = arith.constant 0 : index
    %33 = vector.load %arg3[%c2, %c0_11, %c0_12] : memref<3x128x128xbf16, #tpu.memory_space<vmem>>, vector<1x128x128xbf16>
    %34 = vector.shape_cast %33 : vector<1x128x128xbf16> to vector<128x128xbf16>
    %cst_13 = arith.constant dense<0.000000e+00> : vector<8x128xf32>
    %35 = tpu.matmul %1, %34, %cst_13 {dimension_numbers = #tpu.dot_dimension_numbers<[1], [0], [0], [1], [0, 0, 1, 1], [], []>} : vector<8x128xbf16>, vector<128x128xbf16>, vector<8x128xf32> -> vector<8x128xf32>
    %c1_i32_14 = arith.constant 1 : i32
    %36 = tpu.dynamic_rotate %32 by %c1_i32_14 dim 0 : vector<8x128xf32>, i32 -> vector<8x128xf32>
    %37 = vector.broadcast %25 : vector<8x1xf32> to vector<8x128xf32>
    %38 = arith.mulf %37, %36 : vector<8x128xf32>
    %39 = arith.addf %4, %38 : vector<8x128xf32>
    %c7_i32 = arith.constant 7 : i32
    %40 = tpu.dynamic_rotate %35 by %c7_i32 dim 0 : vector<8x128xf32>, i32 -> vector<8x128xf32>
    %41 = vector.broadcast %29 : vector<8x1xf32> to vector<8x128xf32>
    %42 = arith.mulf %41, %40 : vector<8x128xf32>
    %43 = arith.addf %39, %42 : vector<8x128xf32>
    %44 = math.tanh %0 : vector<8x128xf32>
    %cst_15 = arith.constant 2.000000e+00 : f32
    %45 = vector.broadcast %cst_15 : f32 to vector<8x128xf32>
    %46 = arith.mulf %45, %44 : vector<8x128xf32>
    %47 = arith.mulf %46, %44 : vector<8x128xf32>
    %cst_16 = arith.constant 1.000000e+00 : f32
    %48 = vector.broadcast %cst_16 : f32 to vector<8x128xf32>
    %49 = arith.subf %47, %48 : vector<8x128xf32>
    %cst_17 = arith.constant 2.000000e+00 : f32
    %50 = vector.broadcast %cst_17 : f32 to vector<8x128xf32>
    %51 = arith.mulf %50, %49 : vector<8x128xf32>
    %cst_18 = arith.constant 1.000000e+00 : f32
    %52 = vector.broadcast %cst_18 : f32 to vector<8x128xf32>
    %53 = arith.subf %51, %52 : vector<8x128xf32>
    %54 = arith.mulf %44, %53 : vector<8x128xf32>
    %55 = arith.truncf %44 : vector<8x128xf32> to vector<8x128xbf16>
    %c0_19 = arith.constant 0 : index
    %c0_20 = arith.constant 0 : index
    %c0_21 = arith.constant 0 : index
    %56 = vector.load %arg2[%c0_19, %c0_20, %c0_21] : memref<3x128x128xbf16, #tpu.memory_space<vmem>>, vector<1x128x128xbf16>
    %57 = vector.shape_cast %56 : vector<1x128x128xbf16> to vector<128x128xbf16>
    %cst_22 = arith.constant dense<0.000000e+00> : vector<8x128xf32>
    %58 = tpu.matmul %55, %57, %cst_22 {dimension_numbers = #tpu.dot_dimension_numbers<[1], [0], [0], [1], [0, 0, 1, 1], [], []>} : vector<8x128xbf16>, vector<128x128xbf16>, vector<8x128xf32> -> vector<8x128xf32>
    %59 = arith.addf %43, %58 : vector<8x128xf32>
    %60 = arith.truncf %49 : vector<8x128xf32> to vector<8x128xbf16>
    %c1_23 = arith.constant 1 : index
    %c0_24 = arith.constant 0 : index
    %c0_25 = arith.constant 0 : index
    %61 = vector.load %arg2[%c1_23, %c0_24, %c0_25] : memref<3x128x128xbf16, #tpu.memory_space<vmem>>, vector<1x128x128xbf16>
    %62 = vector.shape_cast %61 : vector<1x128x128xbf16> to vector<128x128xbf16>
    %cst_26 = arith.constant dense<0.000000e+00> : vector<8x128xf32>
    %63 = tpu.matmul %60, %62, %cst_26 {dimension_numbers = #tpu.dot_dimension_numbers<[1], [0], [0], [1], [0, 0, 1, 1], [], []>} : vector<8x128xbf16>, vector<128x128xbf16>, vector<8x128xf32> -> vector<8x128xf32>
    %64 = arith.addf %59, %63 : vector<8x128xf32>
    %65 = arith.truncf %54 : vector<8x128xf32> to vector<8x128xbf16>
    %c2_27 = arith.constant 2 : index
    %c0_28 = arith.constant 0 : index
    %c0_29 = arith.constant 0 : index
    %66 = vector.load %arg2[%c2_27, %c0_28, %c0_29] : memref<3x128x128xbf16, #tpu.memory_space<vmem>>, vector<1x128x128xbf16>
    %67 = vector.shape_cast %66 : vector<1x128x128xbf16> to vector<128x128xbf16>
    %cst_30 = arith.constant dense<0.000000e+00> : vector<8x128xf32>
    %68 = tpu.matmul %65, %67, %cst_30 {dimension_numbers = #tpu.dot_dimension_numbers<[1], [0], [0], [1], [0, 0, 1, 1], [], []>} : vector<8x128xbf16>, vector<128x128xbf16>, vector<8x128xf32> -> vector<8x128xf32>
    %69 = arith.addf %64, %68 : vector<8x128xf32>
    %c0_31 = arith.constant 0 : index
    %c0_32 = arith.constant 0 : index
    %70 = vector.load %arg5[%c0_31, %c0_32] : memref<3x128xf32, #tpu.memory_space<vmem>>, vector<3x128xf32>
    %71 = arith.addf %0, %69 : vector<8x128xf32>
    %72 = vector.extract_strided_slice %70 {offsets = [0, 0], sizes = [1, 128], strides = [1, 1]} : vector<3x128xf32> to vector<1x128xf32>
    %73 = vector.broadcast %72 : vector<1x128xf32> to vector<8x128xf32>
    %74 = arith.addf %71, %73 : vector<8x128xf32>
    %c0_33 = arith.constant 0 : index
    %c0_34 = arith.constant 0 : index
    %75 = vector.load %arg4[%c0_33, %c0_34] : memref<128x128xf32, #tpu.memory_space<vmem>>, vector<128x128xf32>
    %cst_35 = arith.constant dense<0.000000e+00> : vector<8x128xf32>
    %76 = tpu.matmul %74, %75, %cst_35 {dimension_numbers = #tpu.dot_dimension_numbers<[1], [0], [0], [1], [0, 0, 1, 1], [], []>, precision = #tpu.contract_precision<fp32>} : vector<8x128xf32>, vector<128x128xf32>, vector<8x128xf32> -> vector<8x128xf32>
    %cst_36 = arith.constant 3.125000e-02 : f32
    %77 = vector.broadcast %cst_36 : f32 to vector<8x128xf32>
    %78 = arith.mulf %76, %77 : vector<8x128xf32>
    %79 = arith.subf %74, %78 : vector<8x128xf32>
    %80 = arith.mulf %79, %79 : vector<8x128xf32>
    %cst_37 = arith.constant dense<0.000000e+00> : vector<8x128xf32>
    %81 = tpu.matmul %80, %75, %cst_37 {dimension_numbers = #tpu.dot_dimension_numbers<[1], [0], [0], [1], [0, 0, 1, 1], [], []>, precision = #tpu.contract_precision<fp32>} : vector<8x128xf32>, vector<128x128xf32>, vector<8x128xf32> -> vector<8x128xf32>
    %cst_38 = arith.constant 3.125000e-02 : f32
    %82 = vector.broadcast %cst_38 : f32 to vector<8x128xf32>
    %83 = arith.mulf %81, %82 : vector<8x128xf32>
    %cst_39 = arith.constant 9.99999974E-6 : f32
    %84 = vector.broadcast %cst_39 : f32 to vector<8x128xf32>
    %85 = arith.addf %83, %84 : vector<8x128xf32>
    %86 = math.rsqrt %85 : vector<8x128xf32>
    %87 = arith.mulf %79, %86 : vector<8x128xf32>
    %88 = vector.extract_strided_slice %70 {offsets = [1, 0], sizes = [1, 128], strides = [1, 1]} : vector<3x128xf32> to vector<1x128xf32>
    %89 = vector.broadcast %88 : vector<1x128xf32> to vector<8x128xf32>
    %90 = arith.mulf %87, %89 : vector<8x128xf32>
    %91 = vector.extract_strided_slice %70 {offsets = [2, 0], sizes = [1, 128], strides = [1, 1]} : vector<3x128xf32> to vector<1x128xf32>
    %92 = vector.broadcast %91 : vector<1x128xf32> to vector<8x128xf32>
    %93 = arith.addf %90, %92 : vector<8x128xf32>
    %c0_40 = arith.constant 0 : index
    %c0_41 = arith.constant 0 : index
    %94 = vector.load %arg6[%c0_40, %c0_41] : memref<8x128xf32, #tpu.memory_space<vmem>>, vector<8x128xf32>
    tpu.vector_store %arg6[%c0_40, %c0_41], %93 {strides = array<i32>} : memref<8x128xf32, #tpu.memory_space<vmem>>, vector<8x128xf32>,
    return
  }
  func.func @transform_0(%arg0: i32) -> (i32, i32) {
    %c0_i32 = arith.constant 0 : i32
    %c0_i32_0 = arith.constant 0 : i32
    return %arg0, %c0_i32 : i32, i32
  }
  func.func @transform_1(%arg0: i32) -> (i32, i32, i32) {
    %c0_i32 = arith.constant 0 : i32
    %c0_i32_0 = arith.constant 0 : i32
    %c0_i32_1 = arith.constant 0 : i32
    %c0_i32_2 = arith.constant 0 : i32
    return %c0_i32, %c0_i32_0, %c0_i32_1 : i32, i32, i32
  }
  func.func @transform_2(%arg0: i32) -> (i32, i32, i32) {
    %c0_i32 = arith.constant 0 : i32
    %c0_i32_0 = arith.constant 0 : i32
    %c0_i32_1 = arith.constant 0 : i32
    %c0_i32_2 = arith.constant 0 : i32
    return %c0_i32, %c0_i32_0, %c0_i32_1 : i32, i32, i32
  }
  func.func @transform_3(%arg0: i32) -> (i32, i32) {
    %c0_i32 = arith.constant 0 : i32
    %c0_i32_0 = arith.constant 0 : i32
    %c0_i32_1 = arith.constant 0 : i32
    return %c0_i32, %c0_i32_0 : i32, i32
  }
  func.func @transform_4(%arg0: i32) -> (i32, i32) {
    %c0_i32 = arith.constant 0 : i32
    %c0_i32_0 = arith.constant 0 : i32
    %c0_i32_1 = arith.constant 0 : i32
    return %c0_i32, %c0_i32_0 : i32, i32
  }
  func.func @transform_5(%arg0: i32) -> (i32, i32) {
    %c0_i32 = arith.constant 0 : i32
    %c0_i32_0 = arith.constant 0 : i32
    return %arg0, %c0_i32 : i32, i32
  }
}

</mosaic_0001>

<llo_original>
// kernel: tpu_custom_call.1
$region0: #{tpu_custom_call.1}
  #allocation0 [shape = 'u32[]', space=smem, size = 0x4, offset = 0x4, fixed_abs, tag = 'smem constant byte address 0x4 - core index']
  #allocation1 [shape = 'u32[144,128]{1,0:T(1,128)}', space=vmem, size = 0x12000, scoped, tag = 'internal scratch']
  %s0 = inlined_call_operand.hbm [shape: f32[8,128], index: 0, kind: input, shape index: {}]
  %s1 = inlined_call_operand.hbm [shape: bf16[3,128,128], index: 1, kind: input, shape index: {}]
  %s2 = inlined_call_operand.hbm [shape: bf16[3,128,128], index: 2, kind: input, shape index: {}]
  %s3 = inlined_call_operand.hbm [shape: f32[128,128], index: 3, kind: input, shape index: {}]
  %s4 = inlined_call_operand.vmem [shape: f32[3,128], index: 4, kind: input, shape index: {}]
  %s5 = inlined_call_operand.hbm [shape: f32[8,128], index: 5, kind: output, shape index: {}]
  %s6 = sld [smem:[#allocation0]]
  $region46: #{tpu_custom_call.1} parent=0
    _
  %s8 = ssub.s32 1, %s6
  %s9 = scalar_select 0, %s8, %s6
  $region1: #{tpu_custom_call.1} parent=0
    #allocation2 [shape = 'u8[4096]{0}', space=vmem, size = 0x1000, scoped, tag = 'input window, operand 0, single buffered']
    #allocation3 [shape = 's32[1]{0}', space=sflag, size = 0x4, scoped, tag = 'scoped memory for tpu_custom_call.1']
    #allocation4 [shape = 's32[1]{0}', space=sflag, size = 0x4, scoped, tag = 'scoped memory for tpu_custom_call.1']
    #allocation5 [shape = 'u8[98304]{0}', space=vmem, size = 0x18000, scoped, tag = 'input window, operand 1, single buffered']
    #allocation6 [shape = 's32[1]{0}', space=sflag, size = 0x4, scoped, tag = 'scoped memory for tpu_custom_call.1']
    #allocation7 [shape = 'u8[98304]{0}', space=vmem, size = 0x18000, scoped, tag = 'input window, operand 2, single buffered']
    #allocation8 [shape = 'u8[65536]{0}', space=vmem, size = 0x10000, scoped, tag = 'input window, operand 3, single buffered']
    #allocation9 [shape = 's32[1]{0}', space=sflag, size = 0x4, scoped, tag = 'scoped memory for tpu_custom_call.1']
    #allocation10 [shape = 'u8[4096]{0}', space=vmem, size = 0x1000, scoped, tag = 'output window, operand 0, single buffered']
    %10 = vsyncpa [#allocation3], 0
    %11 = vsyncpa [#allocation6], 0
    %12 = vsyncpa [#allocation9], 0
    %13 = vsyncpa [#allocation4], 0
    // Predicated region
    $region2: #{tpu_custom_call.1} parent=1 // pred_check
      _
    $region3: #{tpu_custom_call.1} parent=1 // pred_check_branch
      %15 = sbr.rel (0) target = $region5
    $region4: #{tpu_custom_call.1} parent=1 // pred_region
      %s17 = ssub.s32 128, 128
      %18 = vsyncadd [#allocation3], %s17
      %s20 = sshll.u32 [#allocation2], 4
      %s21 = int_to_ptr.vmem [resolvable:$true] %s20
      %23 = dma.hbm_to_vmem [thread:$0]  %s0, 128, %s21, [#allocation3]
    $region5: #{tpu_custom_call.1} parent=1 // pred_fallthru
      _
    // Predicated region
    $region6: #{tpu_custom_call.1} parent=1 // pred_check
      _
    $region7: #{tpu_custom_call.1} parent=1 // pred_check_branch
      %25 = sbr.rel (0) target = $region9
    $region8: #{tpu_custom_call.1} parent=1 // pred_region
      %s27 = ssub.s32 3072, 3072
      %28 = vsyncadd [#allocation6], %s27
      %s29 = sshll.u32 [#allocation5], 4
      %s30 = int_to_ptr.vmem [resolvable:$true] %s29
      %35 = dma.hbm_to_vmem [thread:$0]  %s1, 3072, %s30, [#allocation6], 64, 64, 4
    $region9: #{tpu_custom_call.1} parent=1 // pred_fallthru
      _
    // Predicated region
    $region10: #{tpu_custom_call.1} parent=1 // pred_check
      _
    $region11: #{tpu_custom_call.1} parent=1 // pred_check_branch
      %37 = sbr.rel (0) target = $region13
    $region12: #{tpu_custom_call.1} parent=1 // pred_region
      %s39 = ssub.s32 3072, 3072
      %40 = vsyncadd [#allocation6], %s39
      %s41 = sshll.u32 [#allocation7], 4
      %s42 = int_to_ptr.vmem [resolvable:$true] %s41
      %47 = dma.hbm_to_vmem [thread:$0]  %s2, 3072, %s42, [#allocation6], 64, 64, 4
    $region13: #{tpu_custom_call.1} parent=1 // pred_fallthru
      _
    // Predicated region
    $region14: #{tpu_custom_call.1} parent=1 // pred_check
      _
    $region15: #{tpu_custom_call.1} parent=1 // pred_check_branch
      %49 = sbr.rel (0) target = $region17
    $region16: #{tpu_custom_call.1} parent=1 // pred_region
      %s51 = ssub.s32 2048, 2048
      %52 = vsyncadd [#allocation9], %s51
      %s53 = sshll.u32 [#allocation8], 4
      %s54 = int_to_ptr.vmem [resolvable:$true] %s53
      %59 = dma.hbm_to_vmem [thread:$0]  %s3, 2048, %s54, [#allocation9], 128, 128, 8
    $region17: #{tpu_custom_call.1} parent=1 // pred_fallthru
      _
    // Predicated region
    $region18: #{tpu_custom_call.1} parent=1 // pred_check
      _
    $region19: #{tpu_custom_call.1} parent=1 // pred_check_branch
      %61 = sbr.rel (0) target = $region21
    $region20: #{tpu_custom_call.1} parent=1 // pred_region
      _
    $region21: #{tpu_custom_call.1} parent=1 // pred_fallthru
      _
    // Predicated region
    $region22: #{tpu_custom_call.1} parent=1 // pred_check
      _
    $region23: #{tpu_custom_call.1} parent=1 // pred_check_branch
      %63 = sbr.rel (0) target = $region25
    $region24: #{tpu_custom_call.1} parent=1 // pred_region
      %64 = dma.done [#allocation3], 128
    $region25: #{tpu_custom_call.1} parent=1 // pred_fallthru
      _
    // Predicated region
    $region26: #{tpu_custom_call.1} parent=1 // pred_check
      _
    $region27: #{tpu_custom_call.1} parent=1 // pred_check_branch
      %66 = sbr.rel (0) target = $region29
    $region28: #{tpu_custom_call.1} parent=1 // pred_region
      %67 = dma.done [#allocation6], 3072
    $region29: #{tpu_custom_call.1} parent=1 // pred_fallthru
      _
    // Predicated region
    $region30: #{tpu_custom_call.1} parent=1 // pred_check
      _
    $region31: #{tpu_custom_call.1} parent=1 // pred_check_branch
      %69 = sbr.rel (0) target = $region33
    $region32: #{tpu_custom_call.1} parent=1 // pred_region
      %70 = dma.done [#allocation6], 3072
    $region33: #{tpu_custom_call.1} parent=1 // pred_fallthru
      _
    // Predicated region
    $region34: #{tpu_custom_call.1} parent=1 // pred_check
      _
    $region35: #{tpu_custom_call.1} parent=1 // pred_check_branch
      %72 = sbr.rel (0) target = $region37
    $region36: #{tpu_custom_call.1} parent=1 // pred_region
      %73 = dma.done [#allocation9], 2048
    $region37: #{tpu_custom_call.1} parent=1 // pred_fallthru
      _
    %v75 = vld [vmem:[#allocation2] sm:$0xff]
    %v76 = vpack.c.bf16 %v75, %v75
    %v77 = vld [vmem:[#allocation7] sm:$0xf]
    %v78 = vld [vmem:[#allocation7 + $0x4] sm:$0xf]
    %v79 = vld [vmem:[#allocation7 + $0x8] sm:$0xf]
    %v80 = vld [vmem:[#allocation7 + $0xc] sm:$0xf]
    %v81 = vld [vmem:[#allocation7 + $0x10] sm:$0xf]
    %v82 = vld [vmem:[#allocation7 + $0x14] sm:$0xf]
    %v83 = vld [vmem:[#allocation7 + $0x18] sm:$0xf]
    %v84 = vld [vmem:[#allocation7 + $0x1c] sm:$0xf]
    %v85 = vld [vmem:[#allocation7 + $0x20] sm:$0xf]
    %v86 = vld [vmem:[#allocation7 + $0x24] sm:$0xf]
    %v87 = vld [vmem:[#allocation7 + $0x28] sm:$0xf]
    %v88 = vld [vmem:[#allocation7 + $0x2c] sm:$0xf]
    %v89 = vld [vmem:[#allocation7 + $0x30] sm:$0xf]
    %v90 = vld [vmem:[#allocation7 + $0x34] sm:$0xf]
    %v91 = vld [vmem:[#allocation7 + $0x38] sm:$0xf]
    %v92 = vld [vmem:[#allocation7 + $0x3c] sm:$0xf]
    %v93 = vlaneseq
    %v94 = vshrl.u32 %v93, 7
    %vm95 = vcmp.lt.s32.totalorder %v94, 0
    %v96 = vsub.s32 0, %v94
    %v97 = vsel %vm95, %v96, %v94
    %v98 = vshrl.u32 %v97, 2
    %v99 = vand.u32 %v97, 3
    %v100 = vsub.s32 0, %v99
    %v101 = vsel %vm95, %v100, %v99
    %vm102 = vcmp.ne.s32.totalorder %v101, 0
    %vm103 = vcmp.lt.s32.totalorder %v101, 0
    %vm104 = vmand %vm103, %vm102
    %v105 = vadd.s32 %v101, 4
    %v106 = vsel %vm104, %v105, %v101
    %vm107 = vcmp.ne.s32.totalorder %v106, 0
    %v108 = vsel %vm107, 1, 0
    %v109 = vcvt.s32.f32 %v108
    %vm110 = vcmp.ne.s32.totalorder %v106, 3
    %v111 = vsel %vm110, 1, 0
    %v112 = vcvt.s32.f32 %v111
    %s113 = scalar_lea.vmem [#allocation7], 64
    %v114 = vld [vmem:[%s113] sm:$0xf]
    %v115 = vld [vmem:[%s113 + $0x4] sm:$0xf]
    %v116 = vld [vmem:[%s113 + $0x8] sm:$0xf]
    %v117 = vld [vmem:[%s113 + $0xc] sm:$0xf]
    %v118 = vld [vmem:[%s113 + $0x10] sm:$0xf]
    %v119 = vld [vmem:[%s113 + $0x14] sm:$0xf]
    %v120 = vld [vmem:[%s113 + $0x18] sm:$0xf]
    %v121 = vld [vmem:[%s113 + $0x1c] sm:$0xf]
    %v122 = vld [vmem:[%s113 + $0x20] sm:$0xf]
    %v123 = vld [vmem:[%s113 + $0x24] sm:$0xf]
    %v124 = vld [vmem:[%s113 + $0x28] sm:$0xf]
    %v125 = vld [vmem:[%s113 + $0x2c] sm:$0xf]
    %v126 = vld [vmem:[%s113 + $0x30] sm:$0xf]
    %v127 = vld [vmem:[%s113 + $0x34] sm:$0xf]
    %v128 = vld [vmem:[%s113 + $0x38] sm:$0xf]
    %v129 = vld [vmem:[%s113 + $0x3c] sm:$0xf]
    %v146 = vunpack.c.l.b16 %v114
    %v147 = vunpack.c.l.b16 %v115
    %v148 = vunpack.c.l.b16 %v116
    %v149 = vunpack.c.l.b16 %v117
    %v150 = vunpack.c.l.b16 %v118
    %v151 = vunpack.c.l.b16 %v119
    %v152 = vunpack.c.l.b16 %v120
    %v153 = vunpack.c.l.b16 %v121
    %v154 = vunpack.c.l.b16 %v122
    %v155 = vunpack.c.l.b16 %v123
    %v156 = vunpack.c.l.b16 %v124
    %v157 = vunpack.c.l.b16 %v125
    %v158 = vunpack.c.l.b16 %v126
    %v159 = vunpack.c.l.b16 %v127
    %v160 = vunpack.c.l.b16 %v128
    %v161 = vunpack.c.l.b16 %v129
    %v162 = vpack.c.b16 %v147, %v146
    %v163 = vpack.c.b16 %v149, %v148
    %v164 = vpack.c.b16 %v151, %v150
    %v165 = vpack.c.b16 %v153, %v152
    %v166 = vpack.c.b16 %v155, %v154
    %v167 = vpack.c.b16 %v157, %v156
    %v168 = vpack.c.b16 %v159, %v158
    %v169 = vpack.c.b16 %v161, %v160
    %178 = vmatprep.subr.bf16.mxu0 0
    %179 = vmatpush1.bf16.msra.mxu0 %v162
    %180 = vmatprep.subr.bf16.mxu0 0
    %181 = vmatpush1.bf16.msra.mxu0 %v163
    %182 = vmatprep.subr.bf16.mxu0 0
    %183 = vmatpush1.bf16.msra.mxu0 %v164
    %184 = vmatprep.subr.bf16.mxu0 0
    %185 = vmatpush1.bf16.msra.mxu0 %v165
    %186 = vmatprep.subr.bf16.mxu0 0
    %187 = vmatpush1.bf16.msra.mxu0 %v166
    %188 = vmatprep.subr.bf16.mxu0 0
    %189 = vmatpush1.bf16.msra.mxu0 %v167
    %190 = vmatprep.subr.bf16.mxu0 0
    %191 = vmatpush1.bf16.msra.mxu0 %v168
    %192 = vmatprep.subr.bf16.mxu0 0
    %193 = vmatpush1.bf16.msra.mxu0 %v169
    %194 = vmatprep.subr.bf16.mxu0 0
    %195 = vmatpush1.bf16.msra.mxu0 0
    %196 = vmatprep.subr.bf16.mxu0 0
    %197 = vmatpush1.bf16.msra.mxu0 0
    %198 = vmatprep.subr.bf16.mxu0 0
    %199 = vmatpush1.bf16.msra.mxu0 0
    %200 = vmatprep.subr.bf16.mxu0 0
    %201 = vmatpush1.bf16.msra.mxu0 0
    %202 = vmatprep.subr.bf16.mxu0 0
    %203 = vmatpush1.bf16.msra.mxu0 0
    %204 = vmatprep.subr.bf16.mxu0 0
    %205 = vmatpush1.bf16.msra.mxu0 0
    %206 = vmatprep.subr.bf16.mxu0 0
    %207 = vmatpush1.bf16.msra.mxu0 0
    %208 = vmatprep.subr.bf16.mxu0 0
    %209 = vmatpush1.bf16.msra.mxu0 0
    %210 = vmatprep.mubr.bf16.mxu0 0
    %211 = vmatmul.mubr.bf16.gmra.mrb[0].mxu0 %v76
    %v212 = vpop.f32.mrb[0].mxu0
    %v213 = vadd.f32 0.0, %v212
    %v214 = vpop.f32.mrb[0].mxu0
    %v215 = vpop.f32.mrb[0].mxu0
    %v216 = vpop.f32.mrb[0].mxu0
    %217 = vdwg.mxu0
    %s218 = scalar_lea.vmem [#allocation7], 128
    %v219 = vld [vmem:[%s218] sm:$0xf]
    %v220 = vld [vmem:[%s218 + $0x4] sm:$0xf]
    %v221 = vld [vmem:[%s218 + $0x8] sm:$0xf]
    %v222 = vld [vmem:[%s218 + $0xc] sm:$0xf]
    %v223 = vld [vmem:[%s218 + $0x10] sm:$0xf]
    %v224 = vld [vmem:[%s218 + $0x14] sm:$0xf]
    %v225 = vld [vmem:[%s218 + $0x18] sm:$0xf]
    %v226 = vld [vmem:[%s218 + $0x1c] sm:$0xf]
    %v227 = vld [vmem:[%s218 + $0x20] sm:$0xf]
    %v228 = vld [vmem:[%s218 + $0x24] sm:$0xf]
    %v229 = vld [vmem:[%s218 + $0x28] sm:$0xf]
    %v230 = vld [vmem:[%s218 + $0x2c] sm:$0xf]
    %v231 = vld [vmem:[%s218 + $0x30] sm:$0xf]
    %v232 = vld [vmem:[%s218 + $0x34] sm:$0xf]
    %v233 = vld [vmem:[%s218 + $0x38] sm:$0xf]
    %v234 = vld [vmem:[%s218 + $0x3c] sm:$0xf]
    %v251 = vunpack.c.l.b16 %v219
    %v252 = vunpack.c.l.b16 %v220
    %v253 = vunpack.c.l.b16 %v221
    %v254 = vunpack.c.l.b16 %v222
    %v255 = vunpack.c.l.b16 %v223
    %v256 = vunpack.c.l.b16 %v224
    %v257 = vunpack.c.l.b16 %v225
    %v258 = vunpack.c.l.b16 %v226
    %v259 = vunpack.c.l.b16 %v227
    %v260 = vunpack.c.l.b16 %v228
    %v261 = vunpack.c.l.b16 %v229
    %v262 = vunpack.c.l.b16 %v230
    %v263 = vunpack.c.l.b16 %v231
    %v264 = vunpack.c.l.b16 %v232
    %v265 = vunpack.c.l.b16 %v233
    %v266 = vunpack.c.l.b16 %v234
    %v267 = vpack.c.b16 %v252, %v251
    %v268 = vpack.c.b16 %v254, %v253
    %v269 = vpack.c.b16 %v256, %v255
    %v270 = vpack.c.b16 %v258, %v257
    %v271 = vpack.c.b16 %v260, %v259
    %v272 = vpack.c.b16 %v262, %v261
    %v273 = vpack.c.b16 %v264, %v263
    %v274 = vpack.c.b16 %v266, %v265
    %283 = vmatprep.subr.bf16.mxu0 0
    %284 = vmatpush1.bf16.msra.mxu0 %v267
    %285 = vmatprep.subr.bf16.mxu0 0
    %286 = vmatpush1.bf16.msra.mxu0 %v268
    %287 = vmatprep.subr.bf16.mxu0 0
    %288 = vmatpush1.bf16.msra.mxu0 %v269
    %289 = vmatprep.subr.bf16.mxu0 0
    %290 = vmatpush1.bf16.msra.mxu0 %v270
    %291 = vmatprep.subr.bf16.mxu0 0
    %292 = vmatpush1.bf16.msra.mxu0 %v271
    %293 = vmatprep.subr.bf16.mxu0 0
    %294 = vmatpush1.bf16.msra.mxu0 %v272
    %295 = vmatprep.subr.bf16.mxu0 0
    %296 = vmatpush1.bf16.msra.mxu0 %v273
    %297 = vmatprep.subr.bf16.mxu0 0
    %298 = vmatpush1.bf16.msra.mxu0 %v274
    %299 = vmatprep.subr.bf16.mxu0 0
    %300 = vmatpush1.bf16.msra.mxu0 0
    %301 = vmatprep.subr.bf16.mxu0 0
    %302 = vmatpush1.bf16.msra.mxu0 0
    %303 = vmatprep.subr.bf16.mxu0 0
    %304 = vmatpush1.bf16.msra.mxu0 0
    %305 = vmatprep.subr.bf16.mxu0 0
    %306 = vmatpush1.bf16.msra.mxu0 0
    %307 = vmatprep.subr.bf16.mxu0 0
    %308 = vmatpush1.bf16.msra.mxu0 0
    %309 = vmatprep.subr.bf16.mxu0 0
    %310 = vmatpush1.bf16.msra.mxu0 0
    %311 = vmatprep.subr.bf16.mxu0 0
    %312 = vmatpush1.bf16.msra.mxu0 0
    %313 = vmatprep.subr.bf16.mxu0 0
    %314 = vmatpush1.bf16.msra.mxu0 0
    %315 = vmatprep.mubr.bf16.mxu0 0
    %316 = vmatmul.mubr.bf16.gmra.mrb[0].mxu0 %v76
    %v317 = vpop.f32.mrb[0].mxu0
    %v318 = vadd.f32 0.0, %v317
    %v319 = vpop.f32.mrb[0].mxu0
    %v320 = vpop.f32.mrb[0].mxu0
    %v321 = vpop.f32.mrb[0].mxu0
    %322 = vdwg.mxu0
    %v323 = vrot.slane %v213, 7
    %v324 = vmul.f32 %v109, %v323
    %v341 = vunpack.c.l.b16 %v77
    %v342 = vunpack.c.l.b16 %v78
    %v343 = vunpack.c.l.b16 %v79
    %v344 = vunpack.c.l.b16 %v80
    %v345 = vunpack.c.l.b16 %v81
    %v346 = vunpack.c.l.b16 %v82
    %v347 = vunpack.c.l.b16 %v83
    %v348 = vunpack.c.l.b16 %v84
    %v349 = vunpack.c.l.b16 %v85
    %v350 = vunpack.c.l.b16 %v86
    %v351 = vunpack.c.l.b16 %v87
    %v352 = vunpack.c.l.b16 %v88
    %v353 = vunpack.c.l.b16 %v89
    %v354 = vunpack.c.l.b16 %v90
    %v355 = vunpack.c.l.b16 %v91
    %v356 = vunpack.c.l.b16 %v92
    %v357 = vpack.c.b16 %v342, %v341
    %v358 = vpack.c.b16 %v344, %v343
    %v359 = vpack.c.b16 %v346, %v345
    %v360 = vpack.c.b16 %v348, %v347
    %v361 = vpack.c.b16 %v350, %v349
    %v362 = vpack.c.b16 %v352, %v351
    %v363 = vpack.c.b16 %v354, %v353
    %v364 = vpack.c.b16 %v356, %v355
    %373 = vmatprep.subr.bf16.mxu0 0
    %374 = vmatpush1.bf16.msra.mxu0 %v357
    %375 = vmatprep.subr.bf16.mxu0 0
    %376 = vmatpush1.bf16.msra.mxu0 %v358
    %377 = vmatprep.subr.bf16.mxu0 0
    %378 = vmatpush1.bf16.msra.mxu0 %v359
    %379 = vmatprep.subr.bf16.mxu0 0
    %380 = vmatpush1.bf16.msra.mxu0 %v360
    %381 = vmatprep.subr.bf16.mxu0 0
    %382 = vmatpush1.bf16.msra.mxu0 %v361
    %383 = vmatprep.subr.bf16.mxu0 0
    %384 = vmatpush1.bf16.msra.mxu0 %v362
    %385 = vmatprep.subr.bf16.mxu0 0
    %386 = vmatpush1.bf16.msra.mxu0 %v363
    %387 = vmatprep.subr.bf16.mxu0 0
    %388 = vmatpush1.bf16.msra.mxu0 %v364
    %389 = vmatprep.subr.bf16.mxu0 0
    %390 = vmatpush1.bf16.msra.mxu0 0
    %391 = vmatprep.subr.bf16.mxu0 0
    %392 = vmatpush1.bf16.msra.mxu0 0
    %393 = vmatprep.subr.bf16.mxu0 0
    %394 = vmatpush1.bf16.msra.mxu0 0
    %395 = vmatprep.subr.bf16.mxu0 0
    %396 = vmatpush1.bf16.msra.mxu0 0
    %397 = vmatprep.subr.bf16.mxu0 0
    %398 = vmatpush1.bf16.msra.mxu0 0
    %399 = vmatprep.subr.bf16.mxu0 0
    %400 = vmatpush1.bf16.msra.mxu0 0
    %401 = vmatprep.subr.bf16.mxu0 0
    %402 = vmatpush1.bf16.msra.mxu0 0
    %403 = vmatprep.subr.bf16.mxu0 0
    %404 = vmatpush1.bf16.msra.mxu0 0
    %405 = vmatprep.mubr.bf16.mxu0 0
    %406 = vmatmul.mubr.bf16.gmra.mrb[0].mxu0 %v76
    %v407 = vpop.f32.mrb[0].mxu0
    %v408 = vadd.f32 %v324, %v407
    %v409 = vpop.f32.mrb[0].mxu0
    %v410 = vpop.f32.mrb[0].mxu0
    %v411 = vpop.f32.mrb[0].mxu0
    %412 = vdwg.mxu0
    %v413 = vrot.slane %v318, 1
    %v414 = vmul.f32 %v112, %v413
    %v415 = vadd.f32 %v408, %v414
    %v416 = vtanh.pop %v75
    %v417 = vmul.f32 %v416, 2.0
    %v418 = vmul.f32 %v417, %v416
    %v419 = vsub.f32 %v418, 1.0
    %v420 = vmul.f32 %v419, 2.0
    %v421 = vsub.f32 %v420, 1.0
    %v422 = vmul.f32 %v416, %v421
    %v423 = vpack.c.bf16 %v416, %v416
    %v424 = vld [vmem:[#allocation5] sm:$0xf]
    %v425 = vld [vmem:[#allocation5 + $0x4] sm:$0xf]
    %v426 = vld [vmem:[#allocation5 + $0x8] sm:$0xf]
    %v427 = vld [vmem:[#allocation5 + $0xc] sm:$0xf]
    %v428 = vld [vmem:[#allocation5 + $0x10] sm:$0xf]
    %v429 = vld [vmem:[#allocation5 + $0x14] sm:$0xf]
    %v430 = vld [vmem:[#allocation5 + $0x18] sm:$0xf]
    %v431 = vld [vmem:[#allocation5 + $0x1c] sm:$0xf]
    %v432 = vld [vmem:[#allocation5 + $0x20] sm:$0xf]
    %v433 = vld [vmem:[#allocation5 + $0x24] sm:$0xf]
    %v434 = vld [vmem:[#allocation5 + $0x28] sm:$0xf]
    %v435 = vld [vmem:[#allocation5 + $0x2c] sm:$0xf]
    %v436 = vld [vmem:[#allocation5 + $0x30] sm:$0xf]
    %v437 = vld [vmem:[#allocation5 + $0x34] sm:$0xf]
    %v438 = vld [vmem:[#allocation5 + $0x38] sm:$0xf]
    %v439 = vld [vmem:[#allocation5 + $0x3c] sm:$0xf]
    %v456 = vunpack.c.l.b16 %v424
    %v457 = vunpack.c.l.b16 %v425
    %v458 = vunpack.c.l.b16 %v426
    %v459 = vunpack.c.l.b16 %v427
    %v460 = vunpack.c.l.b16 %v428
    %v461 = vunpack.c.l.b16 %v429
    %v462 = vunpack.c.l.b16 %v430
    %v463 = vunpack.c.l.b16 %v431
    %v464 = vunpack.c.l.b16 %v432
    %v465 = vunpack.c.l.b16 %v433
    %v466 = vunpack.c.l.b16 %v434
    %v467 = vunpack.c.l.b16 %v435
    %v468 = vunpack.c.l.b16 %v436
    %v469 = vunpack.c.l.b16 %v437
    %v470 = vunpack.c.l.b16 %v438
    %v471 = vunpack.c.l.b16 %v439
    %v472 = vpack.c.b16 %v457, %v456
    %v473 = vpack.c.b16 %v459, %v458
    %v474 = vpack.c.b16 %v461, %v460
    %v475 = vpack.c.b16 %v463, %v462
    %v476 = vpack.c.b16 %v465, %v464
    %v477 = vpack.c.b16 %v467, %v466
    %v478 = vpack.c.b16 %v469, %v468
    %v479 = vpack.c.b16 %v471, %v470
    %488 = vmatprep.subr.bf16.mxu0 0
    %489 = vmatpush1.bf16.msra.mxu0 %v472
    %490 = vmatprep.subr.bf16.mxu0 0
    %491 = vmatpush1.bf16.msra.mxu0 %v473
    %492 = vmatprep.subr.bf16.mxu0 0
    %493 = vmatpush1.bf16.msra.mxu0 %v474
    %494 = vmatprep.subr.bf16.mxu0 0
    %495 = vmatpush1.bf16.msra.mxu0 %v475
    %496 = vmatprep.subr.bf16.mxu0 0
    %497 = vmatpush1.bf16.msra.mxu0 %v476
    %498 = vmatprep.subr.bf16.mxu0 0
    %499 = vmatpush1.bf16.msra.mxu0 %v477
    %500 = vmatprep.subr.bf16.mxu0 0
    %501 = vmatpush1.bf16.msra.mxu0 %v478
    %502 = vmatprep.subr.bf16.mxu0 0
    %503 = vmatpush1.bf16.msra.mxu0 %v479
    %504 = vmatprep.subr.bf16.mxu0 0
    %505 = vmatpush1.bf16.msra.mxu0 0
    %506 = vmatprep.subr.bf16.mxu0 0
    %507 = vmatpush1.bf16.msra.mxu0 0
    %508 = vmatprep.subr.bf16.mxu0 0
    %509 = vmatpush1.bf16.msra.mxu0 0
    %510 = vmatprep.subr.bf16.mxu0 0
    %511 = vmatpush1.bf16.msra.mxu0 0
    %512 = vmatprep.subr.bf16.mxu0 0
    %513 = vmatpush1.bf16.msra.mxu0 0
    %514 = vmatprep.subr.bf16.mxu0 0
    %515 = vmatpush1.bf16.msra.mxu0 0
    %516 = vmatprep.subr.bf16.mxu0 0
    %517 = vmatpush1.bf16.msra.mxu0 0
    %518 = vmatprep.subr.bf16.mxu0 0
    %519 = vmatpush1.bf16.msra.mxu0 0
    %520 = vmatprep.mubr.bf16.mxu0 0
    %521 = vmatmul.mubr.bf16.gmra.mrb[0].mxu0 %v423
    %v522 = vpop.f32.mrb[0].mxu0
    %v523 = vadd.f32 0.0, %v522
    %v524 = vpop.f32.mrb[0].mxu0
    %v525 = vpop.f32.mrb[0].mxu0
    %v526 = vpop.f32.mrb[0].mxu0
    %527 = vdwg.mxu0
    %v528 = vadd.f32 %v415, %v523
    %v529 = vpack.c.bf16 %v419, %v419
    %s530 = scalar_lea.vmem [#allocation5], 64
    %v531 = vld [vmem:[%s530] sm:$0xf]
    %v532 = vld [vmem:[%s530 + $0x4] sm:$0xf]
    %v533 = vld [vmem:[%s530 + $0x8] sm:$0xf]
    %v534 = vld [vmem:[%s530 + $0xc] sm:$0xf]
    %v535 = vld [vmem:[%s530 + $0x10] sm:$0xf]
    %v536 = vld [vmem:[%s530 + $0x14] sm:$0xf]
    %v537 = vld [vmem:[%s530 + $0x18] sm:$0xf]
    %v538 = vld [vmem:[%s530 + $0x1c] sm:$0xf]
    %v539 = vld [vmem:[%s530 + $0x20] sm:$0xf]
    %v540 = vld [vmem:[%s530 + $0x24] sm:$0xf]
    %v541 = vld [vmem:[%s530 + $0x28] sm:$0xf]
    %v542 = vld [vmem:[%s530 + $0x2c] sm:$0xf]
    %v543 = vld [vmem:[%s530 + $0x30] sm:$0xf]
    %v544 = vld [vmem:[%s530 + $0x34] sm:$0xf]
    %v545 = vld [vmem:[%s530 + $0x38] sm:$0xf]
    %v546 = vld [vmem:[%s530 + $0x3c] sm:$0xf]
    %v563 = vunpack.c.l.b16 %v531
    %v564 = vunpack.c.l.b16 %v532
    %v565 = vunpack.c.l.b16 %v533
    %v566 = vunpack.c.l.b16 %v534
    %v567 = vunpack.c.l.b16 %v535
    %v568 = vunpack.c.l.b16 %v536
    %v569 = vunpack.c.l.b16 %v537
    %v570 = vunpack.c.l.b16 %v538
    %v571 = vunpack.c.l.b16 %v539
    %v572 = vunpack.c.l.b16 %v540
    %v573 = vunpack.c.l.b16 %v541
    %v574 = vunpack.c.l.b16 %v542
    %v575 = vunpack.c.l.b16 %v543
    %v576 = vunpack.c.l.b16 %v544
    %v577 = vunpack.c.l.b16 %v545
    %v578 = vunpack.c.l.b16 %v546
    %v579 = vpack.c.b16 %v564, %v563
    %v580 = vpack.c.b16 %v566, %v565
    %v581 = vpack.c.b16 %v568, %v567
    %v582 = vpack.c.b16 %v570, %v569
    %v583 = vpack.c.b16 %v572, %v571
    %v584 = vpack.c.b16 %v574, %v573
    %v585 = vpack.c.b16 %v576, %v575
    %v586 = vpack.c.b16 %v578, %v577
    %595 = vmatprep.subr.bf16.mxu0 0
    %596 = vmatpush1.bf16.msra.mxu0 %v579
    %597 = vmatprep.subr.bf16.mxu0 0
    %598 = vmatpush1.bf16.msra.mxu0 %v580
    %599 = vmatprep.subr.bf16.mxu0 0
    %600 = vmatpush1.bf16.msra.mxu0 %v581
    %601 = vmatprep.subr.bf16.mxu0 0
    %602 = vmatpush1.bf16.msra.mxu0 %v582
    %603 = vmatprep.subr.bf16.mxu0 0
    %604 = vmatpush1.bf16.msra.mxu0 %v583
    %605 = vmatprep.subr.bf16.mxu0 0
    %606 = vmatpush1.bf16.msra.mxu0 %v584
    %607 = vmatprep.subr.bf16.mxu0 0
    %608 = vmatpush1.bf16.msra.mxu0 %v585
    %609 = vmatprep.subr.bf16.mxu0 0
    %610 = vmatpush1.bf16.msra.mxu0 %v586
    %611 = vmatprep.subr.bf16.mxu0 0
    %612 = vmatpush1.bf16.msra.mxu0 0
    %613 = vmatprep.subr.bf16.mxu0 0
    %614 = vmatpush1.bf16.msra.mxu0 0
    %615 = vmatprep.subr.bf16.mxu0 0
    %616 = vmatpush1.bf16.msra.mxu0 0
    %617 = vmatprep.subr.bf16.mxu0 0
    %618 = vmatpush1.bf16.msra.mxu0 0
    %619 = vmatprep.subr.bf16.mxu0 0
    %620 = vmatpush1.bf16.msra.mxu0 0
    %621 = vmatprep.subr.bf16.mxu0 0
    %622 = vmatpush1.bf16.msra.mxu0 0
    %623 = vmatprep.subr.bf16.mxu0 0
    %624 = vmatpush1.bf16.msra.mxu0 0
    %625 = vmatprep.subr.bf16.mxu0 0
    %626 = vmatpush1.bf16.msra.mxu0 0
    %627 = vmatprep.mubr.bf16.mxu0 0
    %628 = vmatmul.mubr.bf16.gmra.mrb[0].mxu0 %v529
    %v629 = vpop.f32.mrb[0].mxu0
    %v630 = vadd.f32 0.0, %v629
    %v631 = vpop.f32.mrb[0].mxu0
    %v632 = vpop.f32.mrb[0].mxu0
    %v633 = vpop.f32.mrb[0].mxu0
    %634 = vdwg.mxu0
    %v635 = vadd.f32 %v528, %v630
    %v636 = vpack.c.bf16 %v422, %v422
    %s637 = scalar_lea.vmem [#allocation5], 128
    %v638 = vld [vmem:[%s637] sm:$0xf]
    %v639 = vld [vmem:[%s637 + $0x4] sm:$0xf]
    %v640 = vld [vmem:[%s637 + $0x8] sm:$0xf]
    %v641 = vld [vmem:[%s637 + $0xc] sm:$0xf]
    %v642 = vld [vmem:[%s637 + $0x10] sm:$0xf]
    %v643 = vld [vmem:[%s637 + $0x14] sm:$0xf]
    %v644 = vld [vmem:[%s637 + $0x18] sm:$0xf]
    %v645 = vld [vmem:[%s637 + $0x1c] sm:$0xf]
    %v646 = vld [vmem:[%s637 + $0x20] sm:$0xf]
    %v647 = vld [vmem:[%s637 + $0x24] sm:$0xf]
    %v648 = vld [vmem:[%s637 + $0x28] sm:$0xf]
    %v649 = vld [vmem:[%s637 + $0x2c] sm:$0xf]
    %v650 = vld [vmem:[%s637 + $0x30] sm:$0xf]
    %v651 = vld [vmem:[%s637 + $0x34] sm:$0xf]
    %v652 = vld [vmem:[%s637 + $0x38] sm:$0xf]
    %v653 = vld [vmem:[%s637 + $0x3c] sm:$0xf]
    %v670 = vunpack.c.l.b16 %v638
    %v671 = vunpack.c.l.b16 %v639
    %v672 = vunpack.c.l.b16 %v640
    %v673 = vunpack.c.l.b16 %v641
    %v674 = vunpack.c.l.b16 %v642
    %v675 = vunpack.c.l.b16 %v643
    %v676 = vunpack.c.l.b16 %v644
    %v677 = vunpack.c.l.b16 %v645
    %v678 = vunpack.c.l.b16 %v646
    %v679 = vunpack.c.l.b16 %v647
    %v680 = vunpack.c.l.b16 %v648
    %v681 = vunpack.c.l.b16 %v649
    %v682 = vunpack.c.l.b16 %v650
    %v683 = vunpack.c.l.b16 %v651
    %v684 = vunpack.c.l.b16 %v652
    %v685 = vunpack.c.l.b16 %v653
    %v686 = vpack.c.b16 %v671, %v670
    %v687 = vpack.c.b16 %v673, %v672
    %v688 = vpack.c.b16 %v675, %v674
    %v689 = vpack.c.b16 %v677, %v676
    %v690 = vpack.c.b16 %v679, %v678
    %v691 = vpack.c.b16 %v681, %v680
    %v692 = vpack.c.b16 %v683, %v682
    %v693 = vpack.c.b16 %v685, %v684
    %702 = vmatprep.subr.bf16.mxu0 0
    %703 = vmatpush1.bf16.msra.mxu0 %v686
    %704 = vmatprep.subr.bf16.mxu0 0
    %705 = vmatpush1.bf16.msra.mxu0 %v687
    %706 = vmatprep.subr.bf16.mxu0 0
    %707 = vmatpush1.bf16.msra.mxu0 %v688
    %708 = vmatprep.subr.bf16.mxu0 0
    %709 = vmatpush1.bf16.msra.mxu0 %v689
    %710 = vmatprep.subr.bf16.mxu0 0
    %711 = vmatpush1.bf16.msra.mxu0 %v690
    %712 = vmatprep.subr.bf16.mxu0 0
    %713 = vmatpush1.bf16.msra.mxu0 %v691
    %714 = vmatprep.subr.bf16.mxu0 0
    %715 = vmatpush1.bf16.msra.mxu0 %v692
    %716 = vmatprep.subr.bf16.mxu0 0
    %717 = vmatpush1.bf16.msra.mxu0 %v693
    %718 = vmatprep.subr.bf16.mxu0 0
    %719 = vmatpush1.bf16.msra.mxu0 0
    %720 = vmatprep.subr.bf16.mxu0 0
    %721 = vmatpush1.bf16.msra.mxu0 0
    %722 = vmatprep.subr.bf16.mxu0 0
    %723 = vmatpush1.bf16.msra.mxu0 0
    %724 = vmatprep.subr.bf16.mxu0 0
    %725 = vmatpush1.bf16.msra.mxu0 0
    %726 = vmatprep.subr.bf16.mxu0 0
    %727 = vmatpush1.bf16.msra.mxu0 0
    %728 = vmatprep.subr.bf16.mxu0 0
    %729 = vmatpush1.bf16.msra.mxu0 0
    %730 = vmatprep.subr.bf16.mxu0 0
    %731 = vmatpush1.bf16.msra.mxu0 0
    %732 = vmatprep.subr.bf16.mxu0 0
    %733 = vmatpush1.bf16.msra.mxu0 0
    %734 = vmatprep.mubr.bf16.mxu0 0
    %735 = vmatmul.mubr.bf16.gmra.mrb[0].mxu0 %v636
    %v736 = vpop.f32.mrb[0].mxu0
    %v737 = vadd.f32 0.0, %v736
    %v738 = vpop.f32.mrb[0].mxu0
    %v739 = vpop.f32.mrb[0].mxu0
    %v740 = vpop.f32.mrb[0].mxu0
    %741 = vdwg.mxu0
    %v742 = vadd.f32 %v635, %v737
    %v743 = vld [vmem:[%s4] sm:$0x7]
    %v744 = vadd.f32 %v75, %v742
    %v745 = vlaneseq
    %v746 = vshrl.u32 %v745, 7
    %v747 = vsub.s32 0, %v746
    %v748 = vrot.slane %v743, %v747
    %v749 = vadd.f32 %v744, %v748
    %v750 = vld [vmem:[#allocation8] sm:$0xff]
    %v751 = vld [vmem:[#allocation8 + $0x8] sm:$0xff]
    %v752 = vld [vmem:[#allocation8 + $0x10] sm:$0xff]
    %v753 = vld [vmem:[#allocation8 + $0x18] sm:$0xff]
    %v754 = vld [vmem:[#allocation8 + $0x20] sm:$0xff]
    %v755 = vld [vmem:[#allocation8 + $0x28] sm:$0xff]
    %v756 = vld [vmem:[#allocation8 + $0x30] sm:$0xff]
    %v757 = vld [vmem:[#allocation8 + $0x38] sm:$0xff]
    %v758 = vld [vmem:[#allocation8 + $0x40] sm:$0xff]
    %v759 = vld [vmem:[#allocation8 + $0x48] sm:$0xff]
    %v760 = vld [vmem:[#allocation8 + $0x50] sm:$0xff]
    %v761 = vld [vmem:[#allocation8 + $0x58] sm:$0xff]
    %v762 = vld [vmem:[#allocation8 + $0x60] sm:$0xff]
    %v763 = vld [vmem:[#allocation8 + $0x68] sm:$0xff]
    %v764 = vld [vmem:[#allocation8 + $0x70] sm:$0xff]
    %v765 = vld [vmem:[#allocation8 + $0x78] sm:$0xff]
    %766 = vmatprep.subr.mxu0 0.0
    %v767 = vand.u32 %v750, 4294901760
    %768 = vmatpush1.msra.mxu0 %v767
    %769 = vmatprep.subr.mxu0 0.0
    %v770 = vand.u32 %v751, 4294901760
    %771 = vmatpush1.msra.mxu0 %v770
    %772 = vmatprep.subr.mxu0 0.0
    %v773 = vand.u32 %v752, 4294901760
    %774 = vmatpush1.msra.mxu0 %v773
    %775 = vmatprep.subr.mxu0 0.0
    %v776 = vand.u32 %v753, 4294901760
    %777 = vmatpush1.msra.mxu0 %v776
    %778 = vmatprep.subr.mxu0 0.0
    %v779 = vand.u32 %v754, 4294901760
    %780 = vmatpush1.msra.mxu0 %v779
    %781 = vmatprep.subr.mxu0 0.0
    %v782 = vand.u32 %v755, 4294901760
    %783 = vmatpush1.msra.mxu0 %v782
    %784 = vmatprep.subr.mxu0 0.0
    %v785 = vand.u32 %v756, 4294901760
    %786 = vmatpush1.msra.mxu0 %v785
    %787 = vmatprep.subr.mxu0 0.0
    %v788 = vand.u32 %v757, 4294901760
    %789 = vmatpush1.msra.mxu0 %v788
    %790 = vmatprep.subr.mxu0 0.0
    %v791 = vand.u32 %v758, 4294901760
    %792 = vmatpush1.msra.mxu0 %v791
    %793 = vmatprep.subr.mxu0 0.0
    %v794 = vand.u32 %v759, 4294901760
    %795 = vmatpush1.msra.mxu0 %v794
    %796 = vmatprep.subr.mxu0 0.0
    %v797 = vand.u32 %v760, 4294901760
    %798 = vmatpush1.msra.mxu0 %v797
    %799 = vmatprep.subr.mxu0 0.0
    %v800 = vand.u32 %v761, 4294901760
    %801 = vmatpush1.msra.mxu0 %v800
    %802 = vmatprep.subr.mxu0 0.0
    %v803 = vand.u32 %v762, 4294901760
    %804 = vmatpush1.msra.mxu0 %v803
    %805 = vmatprep.subr.mxu0 0.0
    %v806 = vand.u32 %v763, 4294901760
    %807 = vmatpush1.msra.mxu0 %v806
    %808 = vmatprep.subr.mxu0 0.0
    %v809 = vand.u32 %v764, 4294901760
    %810 = vmatpush1.msra.mxu0 %v809
    %811 = vmatprep.subr.mxu0 0.0
    %v812 = vand.u32 %v765, 4294901760
    %813 = vmatpush1.msra.mxu0 %v812
    %814 = vmatprep.subr.mxu0 0.0
    %815 = vmatpush1.msra.mxu0 0.0
    %816 = vmatprep.subr.mxu0 0.0
    %817 = vmatpush1.msra.mxu0 0.0
    %818 = vmatprep.subr.mxu0 0.0
    %819 = vmatpush1.msra.mxu0 0.0
    %820 = vmatprep.subr.mxu0 0.0
    %821 = vmatpush1.msra.mxu0 0.0
    %822 = vmatprep.subr.mxu0 0.0
    %823 = vmatpush1.msra.mxu0 0.0
    %824 = vmatprep.subr.mxu0 0.0
    %825 = vmatpush1.msra.mxu0 0.0
    %826 = vmatprep.subr.mxu0 0.0
    %827 = vmatpush1.msra.mxu0 0.0
    %828 = vmatprep.subr.mxu0 0.0
    %829 = vmatpush1.msra.mxu0 0.0
    %830 = vmatprep.subr.mxu0 0.0
    %831 = vmatpush1.msra.mxu0 0.0
    %832 = vmatprep.subr.mxu0 0.0
    %833 = vmatpush1.msra.mxu0 0.0
    %834 = vmatprep.subr.mxu0 0.0
    %835 = vmatpush1.msra.mxu0 0.0
    %836 = vmatprep.subr.mxu0 0.0
    %837 = vmatpush1.msra.mxu0 0.0
    %838 = vmatprep.subr.mxu0 0.0
    %839 = vmatpush1.msra.mxu0 0.0
    %840 = vmatprep.subr.mxu0 0.0
    %841 = vmatpush1.msra.mxu0 0.0
    %842 = vmatprep.subr.mxu0 0.0
    %843 = vmatpush1.msra.mxu0 0.0
    %844 = vmatprep.subr.mxu0 0.0
    %845 = vmatpush1.msra.mxu0 0.0
    %846 = vmatprep.mubr.f32.mxu0 0.0
    %v847 = vand.u32 %v749, 4294901760
    %v848 = vsub.f32 %v749, %v847
    %v849 = vand.u32 %v848, 4294901760
    %v850 = vsub.f32 %v848, %v849
    %v851 = vand.u32 %v850, 4294901760
    %852 = vmatmul.mubr.f32.gmra.mrb[0].mxu0 %v851
    %v853 = vpop.f32.mrb[0].mxu0
    %v854 = vadd.f32 0.0, %v853
    %v855 = vpop.f32.mrb[0].mxu0
    %856 = vdwg.mxu0
    %857 = vmatprep.subr.mxu0 0.0
    %v858 = vand.u32 %v750, 4294901760
    %v859 = vsub.f32 %v750, %v858
    %v860 = vand.u32 %v859, 4294901760
    %v861 = vsub.f32 %v859, %v860
    %v862 = vand.u32 %v861, 4294901760
    %863 = vmatpush1.msra.mxu0 %v862
    %864 = vmatprep.subr.mxu0 0.0
    %v865 = vand.u32 %v751, 4294901760
    %v866 = vsub.f32 %v751, %v865
    %v867 = vand.u32 %v866, 4294901760
    %v868 = vsub.f32 %v866, %v867
    %v869 = vand.u32 %v868, 4294901760
    %870 = vmatpush1.msra.mxu0 %v869
    %871 = vmatprep.subr.mxu0 0.0
    %v872 = vand.u32 %v752, 4294901760
    %v873 = vsub.f32 %v752, %v872
    %v874 = vand.u32 %v873, 4294901760
    %v875 = vsub.f32 %v873, %v874
    %v876 = vand.u32 %v875, 4294901760
    %877 = vmatpush1.msra.mxu0 %v876
    %878 = vmatprep.subr.mxu0 0.0
    %v879 = vand.u32 %v753, 4294901760
    %v880 = vsub.f32 %v753, %v879
    %v881 = vand.u32 %v880, 4294901760
    %v882 = vsub.f32 %v880, %v881
    %v883 = vand.u32 %v882, 4294901760
    %884 = vmatpush1.msra.mxu0 %v883
    %885 = vmatprep.subr.mxu0 0.0
    %v886 = vand.u32 %v754, 4294901760
    %v887 = vsub.f32 %v754, %v886
    %v888 = vand.u32 %v887, 4294901760
    %v889 = vsub.f32 %v887, %v888
    %v890 = vand.u32 %v889, 4294901760
    %891 = vmatpush1.msra.mxu0 %v890
    %892 = vmatprep.subr.mxu0 0.0
    %v893 = vand.u32 %v755, 4294901760
    %v894 = vsub.f32 %v755, %v893
    %v895 = vand.u32 %v894, 4294901760
    %v896 = vsub.f32 %v894, %v895
    %v897 = vand.u32 %v896, 4294901760
    %898 = vmatpush1.msra.mxu0 %v897
    %899 = vmatprep.subr.mxu0 0.0
    %v900 = vand.u32 %v756, 4294901760
    %v901 = vsub.f32 %v756, %v900
    %v902 = vand.u32 %v901, 4294901760
    %v903 = vsub.f32 %v901, %v902
    %v904 = vand.u32 %v903, 4294901760
    %905 = vmatpush1.msra.mxu0 %v904
    %906 = vmatprep.subr.mxu0 0.0
    %v907 = vand.u32 %v757, 4294901760
    %v908 = vsub.f32 %v757, %v907
    %v909 = vand.u32 %v908, 4294901760
    %v910 = vsub.f32 %v908, %v909
    %v911 = vand.u32 %v910, 4294901760
    %912 = vmatpush1.msra.mxu0 %v911
    %913 = vmatprep.subr.mxu0 0.0
    %v914 = vand.u32 %v758, 4294901760
    %v915 = vsub.f32 %v758, %v914
    %v916 = vand.u32 %v915, 4294901760
    %v917 = vsub.f32 %v915, %v916
    %v918 = vand.u32 %v917, 4294901760
    %919 = vmatpush1.msra.mxu0 %v918
    %920 = vmatprep.subr.mxu0 0.0
    %v921 = vand.u32 %v759, 4294901760
    %v922 = vsub.f32 %v759, %v921
    %v923 = vand.u32 %v922, 4294901760
    %v924 = vsub.f32 %v922, %v923
    %v925 = vand.u32 %v924, 4294901760
    %926 = vmatpush1.msra.mxu0 %v925
    %927 = vmatprep.subr.mxu0 0.0
    %v928 = vand.u32 %v760, 4294901760
    %v929 = vsub.f32 %v760, %v928
    %v930 = vand.u32 %v929, 4294901760
    %v931 = vsub.f32 %v929, %v930
    %v932 = vand.u32 %v931, 4294901760
    %933 = vmatpush1.msra.mxu0 %v932
    %934 = vmatprep.subr.mxu0 0.0
    %v935 = vand.u32 %v761, 4294901760
    %v936 = vsub.f32 %v761, %v935
    %v937 = vand.u32 %v936, 4294901760
    %v938 = vsub.f32 %v936, %v937
    %v939 = vand.u32 %v938, 4294901760
    %940 = vmatpush1.msra.mxu0 %v939
    %941 = vmatprep.subr.mxu0 0.0
    %v942 = vand.u32 %v762, 4294901760
    %v943 = vsub.f32 %v762, %v942
    %v944 = vand.u32 %v943, 4294901760
    %v945 = vsub.f32 %v943, %v944
    %v946 = vand.u32 %v945, 4294901760
    %947 = vmatpush1.msra.mxu0 %v946
    %948 = vmatprep.subr.mxu0 0.0
    %v949 = vand.u32 %v763, 4294901760
    %v950 = vsub.f32 %v763, %v949
    %v951 = vand.u32 %v950, 4294901760
    %v952 = vsub.f32 %v950, %v951
    %v953 = vand.u32 %v952, 4294901760
    %954 = vmatpush1.msra.mxu0 %v953
    %955 = vmatprep.subr.mxu0 0.0
    %v956 = vand.u32 %v764, 4294901760
    %v957 = vsub.f32 %v764, %v956
    %v958 = vand.u32 %v957, 4294901760
    %v959 = vsub.f32 %v957, %v958
    %v960 = vand.u32 %v959, 4294901760
    %961 = vmatpush1.msra.mxu0 %v960
    %962 = vmatprep.subr.mxu0 0.0
    %v963 = vand.u32 %v765, 4294901760
    %v964 = vsub.f32 %v765, %v963
    %v965 = vand.u32 %v964, 4294901760
    %v966 = vsub.f32 %v964, %v965
    %v967 = vand.u32 %v966, 4294901760
    %968 = vmatpush1.msra.mxu0 %v967
    %969 = vmatprep.subr.mxu0 0.0
    %970 = vmatpush1.msra.mxu0 0.0
    %971 = vmatprep.subr.mxu0 0.0
    %972 = vmatpush1.msra.mxu0 0.0
    %973 = vmatprep.subr.mxu0 0.0
    %974 = vmatpush1.msra.mxu0 0.0
    %975 = vmatprep.subr.mxu0 0.0
    %976 = vmatpush1.msra.mxu0 0.0
    %977 = vmatprep.subr.mxu0 0.0
    %978 = vmatpush1.msra.mxu0 0.0
    %979 = vmatprep.subr.mxu0 0.0
    %980 = vmatpush1.msra.mxu0 0.0
    %981 = vmatprep.subr.mxu0 0.0
    %982 = vmatpush1.msra.mxu0 0.0
    %983 = vmatprep.subr.mxu0 0.0
    %984 = vmatpush1.msra.mxu0 0.0
    %985 = vmatprep.subr.mxu0 0.0
    %986 = vmatpush1.msra.mxu0 0.0
    %987 = vmatprep.subr.mxu0 0.0
    %988 = vmatpush1.msra.mxu0 0.0
    %989 = vmatprep.subr.mxu0 0.0
    %990 = vmatpush1.msra.mxu0 0.0
    %991 = vmatprep.subr.mxu0 0.0
    %992 = vmatpush1.msra.mxu0 0.0
    %993 = vmatprep.subr.mxu0 0.0
    %994 = vmatpush1.msra.mxu0 0.0
    %995 = vmatprep.subr.mxu0 0.0
    %996 = vmatpush1.msra.mxu0 0.0
    %997 = vmatprep.subr.mxu0 0.0
    %998 = vmatpush1.msra.mxu0 0.0
    %999 = vmatprep.subr.mxu0 0.0
    %1000 = vmatpush1.msra.mxu0 0.0
    %1001 = vmatprep.mubr.f32.mxu0 0.0
    %v1002 = vand.u32 %v749, 4294901760
    %1003 = vmatmul.mubr.f32.gmra.mrb[0].mxu0 %v1002
    %v1004 = vpop.f32.mrb[0].mxu0
    %v1005 = vadd.f32 %v854, %v1004
    %v1006 = vpop.f32.mrb[0].mxu0
    %1007 = vdwg.mxu0
    %1008 = vmatprep.subr.mxu0 0.0
    %v1009 = vand.u32 %v750, 4294901760
    %v1010 = vsub.f32 %v750, %v1009
    %1011 = vmatpush1.msra.mxu0 %v1010
    %1012 = vmatprep.subr.mxu0 0.0
    %v1013 = vand.u32 %v751, 4294901760
    %v1014 = vsub.f32 %v751, %v1013
    %1015 = vmatpush1.msra.mxu0 %v1014
    %1016 = vmatprep.subr.mxu0 0.0
    %v1017 = vand.u32 %v752, 4294901760
    %v1018 = vsub.f32 %v752, %v1017
    %1019 = vmatpush1.msra.mxu0 %v1018
    %1020 = vmatprep.subr.mxu0 0.0
    %v1021 = vand.u32 %v753, 4294901760
    %v1022 = vsub.f32 %v753, %v1021
    %1023 = vmatpush1.msra.mxu0 %v1022
    %1024 = vmatprep.subr.mxu0 0.0
    %v1025 = vand.u32 %v754, 4294901760
    %v1026 = vsub.f32 %v754, %v1025
    %1027 = vmatpush1.msra.mxu0 %v1026
    %1028 = vmatprep.subr.mxu0 0.0
    %v1029 = vand.u32 %v755, 4294901760
    %v1030 = vsub.f32 %v755, %v1029
    %1031 = vmatpush1.msra.mxu0 %v1030
    %1032 = vmatprep.subr.mxu0 0.0
    %v1033 = vand.u32 %v756, 4294901760
    %v1034 = vsub.f32 %v756, %v1033
    %1035 = vmatpush1.msra.mxu0 %v1034
    %1036 = vmatprep.subr.mxu0 0.0
    %v1037 = vand.u32 %v757, 4294901760
    %v1038 = vsub.f32 %v757, %v1037
    %1039 = vmatpush1.msra.mxu0 %v1038
    %1040 = vmatprep.subr.mxu0 0.0
    %v1041 = vand.u32 %v758, 4294901760
    %v1042 = vsub.f32 %v758, %v1041
    %1043 = vmatpush1.msra.mxu0 %v1042
    %1044 = vmatprep.subr.mxu0 0.0
    %v1045 = vand.u32 %v759, 4294901760
    %v1046 = vsub.f32 %v759, %v1045
    %1047 = vmatpush1.msra.mxu0 %v1046
    %1048 = vmatprep.subr.mxu0 0.0
    %v1049 = vand.u32 %v760, 4294901760
    %v1050 = vsub.f32 %v760, %v1049
    %1051 = vmatpush1.msra.mxu0 %v1050
    %1052 = vmatprep.subr.mxu0 0.0
    %v1053 = vand.u32 %v761, 4294901760
    %v1054 = vsub.f32 %v761, %v1053
    %1055 = vmatpush1.msra.mxu0 %v1054
    %1056 = vmatprep.subr.mxu0 0.0
    %v1057 = vand.u32 %v762, 4294901760
    %v1058 = vsub.f32 %v762, %v1057
    %1059 = vmatpush1.msra.mxu0 %v1058
    %1060 = vmatprep.subr.mxu0 0.0
    %v1061 = vand.u32 %v763, 4294901760
    %v1062 = vsub.f32 %v763, %v1061
    %1063 = vmatpush1.msra.mxu0 %v1062
    %1064 = vmatprep.subr.mxu0 0.0
    %v1065 = vand.u32 %v764, 4294901760
    %v1066 = vsub.f32 %v764, %v1065
    %1067 = vmatpush1.msra.mxu0 %v1066
    %1068 = vmatprep.subr.mxu0 0.0
    %v1069 = vand.u32 %v765, 4294901760
    %v1070 = vsub.f32 %v765, %v1069
    %1071 = vmatpush1.msra.mxu0 %v1070
    %1072 = vmatprep.subr.mxu0 0.0
    %1073 = vmatpush1.msra.mxu0 0.0
    %1074 = vmatprep.subr.mxu0 0.0
    %1075 = vmatpush1.msra.mxu0 0.0
    %1076 = vmatprep.subr.mxu0 0.0
    %1077 = vmatpush1.msra.mxu0 0.0
    %1078 = vmatprep.subr.mxu0 0.0
    %1079 = vmatpush1.msra.mxu0 0.0
    %1080 = vmatprep.subr.mxu0 0.0
    %1081 = vmatpush1.msra.mxu0 0.0
    %1082 = vmatprep.subr.mxu0 0.0
    %1083 = vmatpush1.msra.mxu0 0.0
    %1084 = vmatprep.subr.mxu0 0.0
    %1085 = vmatpush1.msra.mxu0 0.0
    %1086 = vmatprep.subr.mxu0 0.0
    %1087 = vmatpush1.msra.mxu0 0.0
    %1088 = vmatprep.subr.mxu0 0.0
    %1089 = vmatpush1.msra.mxu0 0.0
    %1090 = vmatprep.subr.mxu0 0.0
    %1091 = vmatpush1.msra.mxu0 0.0
    %1092 = vmatprep.subr.mxu0 0.0
    %1093 = vmatpush1.msra.mxu0 0.0
    %1094 = vmatprep.subr.mxu0 0.0
    %1095 = vmatpush1.msra.mxu0 0.0
    %1096 = vmatprep.subr.mxu0 0.0
    %1097 = vmatpush1.msra.mxu0 0.0
    %1098 = vmatprep.subr.mxu0 0.0
    %1099 = vmatpush1.msra.mxu0 0.0
    %1100 = vmatprep.subr.mxu0 0.0
    %1101 = vmatpush1.msra.mxu0 0.0
    %1102 = vmatprep.subr.mxu0 0.0
    %1103 = vmatpush1.msra.mxu0 0.0
    %1104 = vmatprep.mubr.f32.mxu0 0.0
    %v1105 = vand.u32 %v749, 4294901760
    %v1106 = vsub.f32 %v749, %v1105
    %1107 = vmatmul.mubr.f32.gmra.mrb[0].mxu0 %v1106
    %v1108 = vpop.f32.mrb[0].mxu0
    %v1109 = vadd.f32 %v1005, %v1108
    %v1110 = vpop.f32.mrb[0].mxu0
    %1111 = vdwg.mxu0
    %1112 = vmatprep.subr.mxu0 0.0
    %v1113 = vand.u32 %v750, 4294901760
    %1114 = vmatpush1.msra.mxu0 %v1113
    %1115 = vmatprep.subr.mxu0 0.0
    %v1116 = vand.u32 %v751, 4294901760
    %1117 = vmatpush1.msra.mxu0 %v1116
    %1118 = vmatprep.subr.mxu0 0.0
    %v1119 = vand.u32 %v752, 4294901760
    %1120 = vmatpush1.msra.mxu0 %v1119
    %1121 = vmatprep.subr.mxu0 0.0
    %v1122 = vand.u32 %v753, 4294901760
    %1123 = vmatpush1.msra.mxu0 %v1122
    %1124 = vmatprep.subr.mxu0 0.0
    %v1125 = vand.u32 %v754, 4294901760
    %1126 = vmatpush1.msra.mxu0 %v1125
    %1127 = vmatprep.subr.mxu0 0.0
    %v1128 = vand.u32 %v755, 4294901760
    %1129 = vmatpush1.msra.mxu0 %v1128
    %1130 = vmatprep.subr.mxu0 0.0
    %v1131 = vand.u32 %v756, 4294901760
    %1132 = vmatpush1.msra.mxu0 %v1131
    %1133 = vmatprep.subr.mxu0 0.0
    %v1134 = vand.u32 %v757, 4294901760
    %1135 = vmatpush1.msra.mxu0 %v1134
    %1136 = vmatprep.subr.mxu0 0.0
    %v1137 = vand.u32 %v758, 4294901760
    %1138 = vmatpush1.msra.mxu0 %v1137
    %1139 = vmatprep.subr.mxu0 0.0
    %v1140 = vand.u32 %v759, 4294901760
    %1141 = vmatpush1.msra.mxu0 %v1140
    %1142 = vmatprep.subr.mxu0 0.0
    %v1143 = vand.u32 %v760, 4294901760
    %1144 = vmatpush1.msra.mxu0 %v1143
    %1145 = vmatprep.subr.mxu0 0.0
    %v1146 = vand.u32 %v761, 4294901760
    %1147 = vmatpush1.msra.mxu0 %v1146
    %1148 = vmatprep.subr.mxu0 0.0
    %v1149 = vand.u32 %v762, 4294901760
    %1150 = vmatpush1.msra.mxu0 %v1149
    %1151 = vmatprep.subr.mxu0 0.0
    %v1152 = vand.u32 %v763, 4294901760
    %1153 = vmatpush1.msra.mxu0 %v1152
    %1154 = vmatprep.subr.mxu0 0.0
    %v1155 = vand.u32 %v764, 4294901760
    %1156 = vmatpush1.msra.mxu0 %v1155
    %1157 = vmatprep.subr.mxu0 0.0
    %v1158 = vand.u32 %v765, 4294901760
    %1159 = vmatpush1.msra.mxu0 %v1158
    %1160 = vmatprep.subr.mxu0 0.0
    %1161 = vmatpush1.msra.mxu0 0.0
    %1162 = vmatprep.subr.mxu0 0.0
    %1163 = vmatpush1.msra.mxu0 0.0
    %1164 = vmatprep.subr.mxu0 0.0
    %1165 = vmatpush1.msra.mxu0 0.0
    %1166 = vmatprep.subr.mxu0 0.0
    %1167 = vmatpush1.msra.mxu0 0.0
    %1168 = vmatprep.subr.mxu0 0.0
    %1169 = vmatpush1.msra.mxu0 0.0
    %1170 = vmatprep.subr.mxu0 0.0
    %1171 = vmatpush1.msra.mxu0 0.0
    %1172 = vmatprep.subr.mxu0 0.0
    %1173 = vmatpush1.msra.mxu0 0.0
    %1174 = vmatprep.subr.mxu0 0.0
    %1175 = vmatpush1.msra.mxu0 0.0
    %1176 = vmatprep.subr.mxu0 0.0
    %1177 = vmatpush1.msra.mxu0 0.0
    %1178 = vmatprep.subr.mxu0 0.0
    %1179 = vmatpush1.msra.mxu0 0.0
    %1180 = vmatprep.subr.mxu0 0.0
    %1181 = vmatpush1.msra.mxu0 0.0
    %1182 = vmatprep.subr.mxu0 0.0
    %1183 = vmatpush1.msra.mxu0 0.0
    %1184 = vmatprep.subr.mxu0 0.0
    %1185 = vmatpush1.msra.mxu0 0.0
    %1186 = vmatprep.subr.mxu0 0.0
    %1187 = vmatpush1.msra.mxu0 0.0
    %1188 = vmatprep.subr.mxu0 0.0
    %1189 = vmatpush1.msra.mxu0 0.0
    %1190 = vmatprep.subr.mxu0 0.0
    %1191 = vmatpush1.msra.mxu0 0.0
    %1192 = vmatprep.mubr.f32.mxu0 0.0
    %v1193 = vand.u32 %v749, 4294901760
    %v1194 = vsub.f32 %v749, %v1193
    %v1195 = vand.u32 %v1194, 4294901760
    %1196 = vmatmul.mubr.f32.gmra.mrb[0].mxu0 %v1195
    %v1197 = vpop.f32.mrb[0].mxu0
    %v1198 = vadd.f32 %v1109, %v1197
    %v1199 = vpop.f32.mrb[0].mxu0
    %1200 = vdwg.mxu0
    %1201 = vmatprep.subr.mxu0 0.0
    %v1202 = vand.u32 %v750, 4294901760
    %v1203 = vsub.f32 %v750, %v1202
    %v1204 = vand.u32 %v1203, 4294901760
    %1205 = vmatpush1.msra.mxu0 %v1204
    %1206 = vmatprep.subr.mxu0 0.0
    %v1207 = vand.u32 %v751, 4294901760
    %v1208 = vsub.f32 %v751, %v1207
    %v1209 = vand.u32 %v1208, 4294901760
    %1210 = vmatpush1.msra.mxu0 %v1209
    %1211 = vmatprep.subr.mxu0 0.0
    %v1212 = vand.u32 %v752, 4294901760
    %v1213 = vsub.f32 %v752, %v1212
    %v1214 = vand.u32 %v1213, 4294901760
    %1215 = vmatpush1.msra.mxu0 %v1214
    %1216 = vmatprep.subr.mxu0 0.0
    %v1217 = vand.u32 %v753, 4294901760
    %v1218 = vsub.f32 %v753, %v1217
    %v1219 = vand.u32 %v1218, 4294901760
    %1220 = vmatpush1.msra.mxu0 %v1219
    %1221 = vmatprep.subr.mxu0 0.0
    %v1222 = vand.u32 %v754, 4294901760
    %v1223 = vsub.f32 %v754, %v1222
    %v1224 = vand.u32 %v1223, 4294901760
    %1225 = vmatpush1.msra.mxu0 %v1224
    %1226 = vmatprep.subr.mxu0 0.0
    %v1227 = vand.u32 %v755, 4294901760
    %v1228 = vsub.f32 %v755, %v1227
    %v1229 = vand.u32 %v1228, 4294901760
    %1230 = vmatpush1.msra.mxu0 %v1229
    %1231 = vmatprep.subr.mxu0 0.0
    %v1232 = vand.u32 %v756, 4294901760
    %v1233 = vsub.f32 %v756, %v1232
    %v1234 = vand.u32 %v1233, 4294901760
    %1235 = vmatpush1.msra.mxu0 %v1234
    %1236 = vmatprep.subr.mxu0 0.0
    %v1237 = vand.u32 %v757, 4294901760
    %v1238 = vsub.f32 %v757, %v1237
    %v1239 = vand.u32 %v1238, 4294901760
    %1240 = vmatpush1.msra.mxu0 %v1239
    %1241 = vmatprep.subr.mxu0 0.0
    %v1242 = vand.u32 %v758, 4294901760
    %v1243 = vsub.f32 %v758, %v1242
    %v1244 = vand.u32 %v1243, 4294901760
    %1245 = vmatpush1.msra.mxu0 %v1244
    %1246 = vmatprep.subr.mxu0 0.0
    %v1247 = vand.u32 %v759, 4294901760
    %v1248 = vsub.f32 %v759, %v1247
    %v1249 = vand.u32 %v1248, 4294901760
    %1250 = vmatpush1.msra.mxu0 %v1249
    %1251 = vmatprep.subr.mxu0 0.0
    %v1252 = vand.u32 %v760, 4294901760
    %v1253 = vsub.f32 %v760, %v1252
    %v1254 = vand.u32 %v1253, 4294901760
    %1255 = vmatpush1.msra.mxu0 %v1254
    %1256 = vmatprep.subr.mxu0 0.0
    %v1257 = vand.u32 %v761, 4294901760
    %v1258 = vsub.f32 %v761, %v1257
    %v1259 = vand.u32 %v1258, 4294901760
    %1260 = vmatpush1.msra.mxu0 %v1259
    %1261 = vmatprep.subr.mxu0 0.0
    %v1262 = vand.u32 %v762, 4294901760
    %v1263 = vsub.f32 %v762, %v1262
    %v1264 = vand.u32 %v1263, 4294901760
    %1265 = vmatpush1.msra.mxu0 %v1264
    %1266 = vmatprep.subr.mxu0 0.0
    %v1267 = vand.u32 %v763, 4294901760
    %v1268 = vsub.f32 %v763, %v1267
    %v1269 = vand.u32 %v1268, 4294901760
    %1270 = vmatpush1.msra.mxu0 %v1269
    %1271 = vmatprep.subr.mxu0 0.0
    %v1272 = vand.u32 %v764, 4294901760
    %v1273 = vsub.f32 %v764, %v1272
    %v1274 = vand.u32 %v1273, 4294901760
    %1275 = vmatpush1.msra.mxu0 %v1274
    %1276 = vmatprep.subr.mxu0 0.0
    %v1277 = vand.u32 %v765, 4294901760
    %v1278 = vsub.f32 %v765, %v1277
    %v1279 = vand.u32 %v1278, 4294901760
    %1280 = vmatpush1.msra.mxu0 %v1279
    %1281 = vmatprep.subr.mxu0 0.0
    %1282 = vmatpush1.msra.mxu0 0.0
    %1283 = vmatprep.subr.mxu0 0.0
    %1284 = vmatpush1.msra.mxu0 0.0
    %1285 = vmatprep.subr.mxu0 0.0
    %1286 = vmatpush1.msra.mxu0 0.0
    %1287 = vmatprep.subr.mxu0 0.0
    %1288 = vmatpush1.msra.mxu0 0.0
    %1289 = vmatprep.subr.mxu0 0.0
    %1290 = vmatpush1.msra.mxu0 0.0
    %1291 = vmatprep.subr.mxu0 0.0
    %1292 = vmatpush1.msra.mxu0 0.0
    %1293 = vmatprep.subr.mxu0 0.0
    %1294 = vmatpush1.msra.mxu0 0.0
    %1295 = vmatprep.subr.mxu0 0.0
    %1296 = vmatpush1.msra.mxu0 0.0
    %1297 = vmatprep.subr.mxu0 0.0
    %1298 = vmatpush1.msra.mxu0 0.0
    %1299 = vmatprep.subr.mxu0 0.0
    %1300 = vmatpush1.msra.mxu0 0.0
    %1301 = vmatprep.subr.mxu0 0.0
    %1302 = vmatpush1.msra.mxu0 0.0
    %1303 = vmatprep.subr.mxu0 0.0
    %1304 = vmatpush1.msra.mxu0 0.0
    %1305 = vmatprep.subr.mxu0 0.0
    %1306 = vmatpush1.msra.mxu0 0.0
    %1307 = vmatprep.subr.mxu0 0.0
    %1308 = vmatpush1.msra.mxu0 0.0
    %1309 = vmatprep.subr.mxu0 0.0
    %1310 = vmatpush1.msra.mxu0 0.0
    %1311 = vmatprep.subr.mxu0 0.0
    %1312 = vmatpush1.msra.mxu0 0.0
    %1313 = vmatprep.mubr.f32.mxu0 0.0
    %v1314 = vand.u32 %v749, 4294901760
    %1315 = vmatmul.mubr.f32.gmra.mrb[0].mxu0 %v1314
    %v1316 = vpop.f32.mrb[0].mxu0
    %v1317 = vadd.f32 %v1198, %v1316
    %v1318 = vpop.f32.mrb[0].mxu0
    %1319 = vdwg.mxu0
    %1320 = vmatprep.subr.mxu0 0.0
    %v1321 = vand.u32 %v750, 4294901760
    %1322 = vmatpush1.msra.mxu0 %v1321
    %1323 = vmatprep.subr.mxu0 0.0
    %v1324 = vand.u32 %v751, 4294901760
    %1325 = vmatpush1.msra.mxu0 %v1324
    %1326 = vmatprep.subr.mxu0 0.0
    %v1327 = vand.u32 %v752, 4294901760
    %1328 = vmatpush1.msra.mxu0 %v1327
    %1329 = vmatprep.subr.mxu0 0.0
    %v1330 = vand.u32 %v753, 4294901760
    %1331 = vmatpush1.msra.mxu0 %v1330
    %1332 = vmatprep.subr.mxu0 0.0
    %v1333 = vand.u32 %v754, 4294901760
    %1334 = vmatpush1.msra.mxu0 %v1333
    %1335 = vmatprep.subr.mxu0 0.0
    %v1336 = vand.u32 %v755, 4294901760
    %1337 = vmatpush1.msra.mxu0 %v1336
    %1338 = vmatprep.subr.mxu0 0.0
    %v1339 = vand.u32 %v756, 4294901760
    %1340 = vmatpush1.msra.mxu0 %v1339
    %1341 = vmatprep.subr.mxu0 0.0
    %v1342 = vand.u32 %v757, 4294901760
    %1343 = vmatpush1.msra.mxu0 %v1342
    %1344 = vmatprep.subr.mxu0 0.0
    %v1345 = vand.u32 %v758, 4294901760
    %1346 = vmatpush1.msra.mxu0 %v1345
    %1347 = vmatprep.subr.mxu0 0.0
    %v1348 = vand.u32 %v759, 4294901760
    %1349 = vmatpush1.msra.mxu0 %v1348
    %1350 = vmatprep.subr.mxu0 0.0
    %v1351 = vand.u32 %v760, 4294901760
    %1352 = vmatpush1.msra.mxu0 %v1351
    %1353 = vmatprep.subr.mxu0 0.0
    %v1354 = vand.u32 %v761, 4294901760
    %1355 = vmatpush1.msra.mxu0 %v1354
    %1356 = vmatprep.subr.mxu0 0.0
    %v1357 = vand.u32 %v762, 4294901760
    %1358 = vmatpush1.msra.mxu0 %v1357
    %1359 = vmatprep.subr.mxu0 0.0
    %v1360 = vand.u32 %v763, 4294901760
    %1361 = vmatpush1.msra.mxu0 %v1360
    %1362 = vmatprep.subr.mxu0 0.0
    %v1363 = vand.u32 %v764, 4294901760
    %1364 = vmatpush1.msra.mxu0 %v1363
    %1365 = vmatprep.subr.mxu0 0.0
    %v1366 = vand.u32 %v765, 4294901760
    %1367 = vmatpush1.msra.mxu0 %v1366
    %1368 = vmatprep.subr.mxu0 0.0
    %1369 = vmatpush1.msra.mxu0 0.0
    %1370 = vmatprep.subr.mxu0 0.0
    %1371 = vmatpush1.msra.mxu0 0.0
    %1372 = vmatprep.subr.mxu0 0.0
    %1373 = vmatpush1.msra.mxu0 0.0
    %1374 = vmatprep.subr.mxu0 0.0
    %1375 = vmatpush1.msra.mxu0 0.0
    %1376 = vmatprep.subr.mxu0 0.0
    %1377 = vmatpush1.msra.mxu0 0.0
    %1378 = vmatprep.subr.mxu0 0.0
    %1379 = vmatpush1.msra.mxu0 0.0
    %1380 = vmatprep.subr.mxu0 0.0
    %1381 = vmatpush1.msra.mxu0 0.0
    %1382 = vmatprep.subr.mxu0 0.0
    %1383 = vmatpush1.msra.mxu0 0.0
    %1384 = vmatprep.subr.mxu0 0.0
    %1385 = vmatpush1.msra.mxu0 0.0
    %1386 = vmatprep.subr.mxu0 0.0
    %1387 = vmatpush1.msra.mxu0 0.0
    %1388 = vmatprep.subr.mxu0 0.0
    %1389 = vmatpush1.msra.mxu0 0.0
    %1390 = vmatprep.subr.mxu0 0.0
    %1391 = vmatpush1.msra.mxu0 0.0
    %1392 = vmatprep.subr.mxu0 0.0
    %1393 = vmatpush1.msra.mxu0 0.0
    %1394 = vmatprep.subr.mxu0 0.0
    %1395 = vmatpush1.msra.mxu0 0.0
    %1396 = vmatprep.subr.mxu0 0.0
    %1397 = vmatpush1.msra.mxu0 0.0
    %1398 = vmatprep.subr.mxu0 0.0
    %1399 = vmatpush1.msra.mxu0 0.0
    %1400 = vmatprep.mubr.f32.mxu0 0.0
    %v1401 = vand.u32 %v749, 4294901760
    %1402 = vmatmul.mubr.f32.gmra.mrb[0].mxu0 %v1401
    %v1403 = vpop.f32.mrb[0].mxu0
    %v1404 = vadd.f32 %v1317, %v1403
    %v1405 = vpop.f32.mrb[0].mxu0
    %1406 = vdwg.mxu0
    %v1407 = vmul.f32 %v1404, 0.03125
    %v1408 = vsub.f32 %v749, %v1407
    %v1409 = vmul.f32 %v1408, %v1408
    %1410 = vmatprep.subr.mxu0 0.0
    %v1411 = vand.u32 %v750, 4294901760
    %1412 = vmatpush1.msra.mxu0 %v1411
    %1413 = vmatprep.subr.mxu0 0.0
    %v1414 = vand.u32 %v751, 4294901760
    %1415 = vmatpush1.msra.mxu0 %v1414
    %1416 = vmatprep.subr.mxu0 0.0
    %v1417 = vand.u32 %v752, 4294901760
    %1418 = vmatpush1.msra.mxu0 %v1417
    %1419 = vmatprep.subr.mxu0 0.0
    %v1420 = vand.u32 %v753, 4294901760
    %1421 = vmatpush1.msra.mxu0 %v1420
    %1422 = vmatprep.subr.mxu0 0.0
    %v1423 = vand.u32 %v754, 4294901760
    %1424 = vmatpush1.msra.mxu0 %v1423
    %1425 = vmatprep.subr.mxu0 0.0
    %v1426 = vand.u32 %v755, 4294901760
    %1427 = vmatpush1.msra.mxu0 %v1426
    %1428 = vmatprep.subr.mxu0 0.0
    %v1429 = vand.u32 %v756, 4294901760
    %1430 = vmatpush1.msra.mxu0 %v1429
    %1431 = vmatprep.subr.mxu0 0.0
    %v1432 = vand.u32 %v757, 4294901760
    %1433 = vmatpush1.msra.mxu0 %v1432
    %1434 = vmatprep.subr.mxu0 0.0
    %v1435 = vand.u32 %v758, 4294901760
    %1436 = vmatpush1.msra.mxu0 %v1435
    %1437 = vmatprep.subr.mxu0 0.0
    %v1438 = vand.u32 %v759, 4294901760
    %1439 = vmatpush1.msra.mxu0 %v1438
    %1440 = vmatprep.subr.mxu0 0.0
    %v1441 = vand.u32 %v760, 4294901760
    %1442 = vmatpush1.msra.mxu0 %v1441
    %1443 = vmatprep.subr.mxu0 0.0
    %v1444 = vand.u32 %v761, 4294901760
    %1445 = vmatpush1.msra.mxu0 %v1444
    %1446 = vmatprep.subr.mxu0 0.0
    %v1447 = vand.u32 %v762, 4294901760
    %1448 = vmatpush1.msra.mxu0 %v1447
    %1449 = vmatprep.subr.mxu0 0.0
    %v1450 = vand.u32 %v763, 4294901760
    %1451 = vmatpush1.msra.mxu0 %v1450
    %1452 = vmatprep.subr.mxu0 0.0
    %v1453 = vand.u32 %v764, 4294901760
    %1454 = vmatpush1.msra.mxu0 %v1453
    %1455 = vmatprep.subr.mxu0 0.0
    %v1456 = vand.u32 %v765, 4294901760
    %1457 = vmatpush1.msra.mxu0 %v1456
    %1458 = vmatprep.subr.mxu0 0.0
    %1459 = vmatpush1.msra.mxu0 0.0
    %1460 = vmatprep.subr.mxu0 0.0
    %1461 = vmatpush1.msra.mxu0 0.0
    %1462 = vmatprep.subr.mxu0 0.0
    %1463 = vmatpush1.msra.mxu0 0.0
    %1464 = vmatprep.subr.mxu0 0.0
    %1465 = vmatpush1.msra.mxu0 0.0
    %1466 = vmatprep.subr.mxu0 0.0
    %1467 = vmatpush1.msra.mxu0 0.0
    %1468 = vmatprep.subr.mxu0 0.0
    %1469 = vmatpush1.msra.mxu0 0.0
    %1470 = vmatprep.subr.mxu0 0.0
    %1471 = vmatpush1.msra.mxu0 0.0
    %1472 = vmatprep.subr.mxu0 0.0
    %1473 = vmatpush1.msra.mxu0 0.0
    %1474 = vmatprep.subr.mxu0 0.0
    %1475 = vmatpush1.msra.mxu0 0.0
    %1476 = vmatprep.subr.mxu0 0.0
    %1477 = vmatpush1.msra.mxu0 0.0
    %1478 = vmatprep.subr.mxu0 0.0
    %1479 = vmatpush1.msra.mxu0 0.0
    %1480 = vmatprep.subr.mxu0 0.0
    %1481 = vmatpush1.msra.mxu0 0.0
    %1482 = vmatprep.subr.mxu0 0.0
    %1483 = vmatpush1.msra.mxu0 0.0
    %1484 = vmatprep.subr.mxu0 0.0
    %1485 = vmatpush1.msra.mxu0 0.0
    %1486 = vmatprep.subr.mxu0 0.0
    %1487 = vmatpush1.msra.mxu0 0.0
    %1488 = vmatprep.subr.mxu0 0.0
    %1489 = vmatpush1.msra.mxu0 0.0
    %1490 = vmatprep.mubr.f32.mxu0 0.0
    %v1491 = vand.u32 %v1409, 4294901760
    %v1492 = vsub.f32 %v1409, %v1491
    %v1493 = vand.u32 %v1492, 4294901760
    %v1494 = vsub.f32 %v1492, %v1493
    %v1495 = vand.u32 %v1494, 4294901760
    %1496 = vmatmul.mubr.f32.gmra.mrb[0].mxu0 %v1495
    %v1497 = vpop.f32.mrb[0].mxu0
    %v1498 = vadd.f32 0.0, %v1497
    %v1499 = vpop.f32.mrb[0].mxu0
    %1500 = vdwg.mxu0
    %1501 = vmatprep.subr.mxu0 0.0
    %v1502 = vand.u32 %v750, 4294901760
    %v1503 = vsub.f32 %v750, %v1502
    %v1504 = vand.u32 %v1503, 4294901760
    %v1505 = vsub.f32 %v1503, %v1504
    %v1506 = vand.u32 %v1505, 4294901760
    %1507 = vmatpush1.msra.mxu0 %v1506
    %1508 = vmatprep.subr.mxu0 0.0
    %v1509 = vand.u32 %v751, 4294901760
    %v1510 = vsub.f32 %v751, %v1509
    %v1511 = vand.u32 %v1510, 4294901760
    %v1512 = vsub.f32 %v1510, %v1511
    %v1513 = vand.u32 %v1512, 4294901760
    %1514 = vmatpush1.msra.mxu0 %v1513
    %1515 = vmatprep.subr.mxu0 0.0
    %v1516 = vand.u32 %v752, 4294901760
    %v1517 = vsub.f32 %v752, %v1516
    %v1518 = vand.u32 %v1517, 4294901760
    %v1519 = vsub.f32 %v1517, %v1518
    %v1520 = vand.u32 %v1519, 4294901760
    %1521 = vmatpush1.msra.mxu0 %v1520
    %1522 = vmatprep.subr.mxu0 0.0
    %v1523 = vand.u32 %v753, 4294901760
    %v1524 = vsub.f32 %v753, %v1523
    %v1525 = vand.u32 %v1524, 4294901760
    %v1526 = vsub.f32 %v1524, %v1525
    %v1527 = vand.u32 %v1526, 4294901760
    %1528 = vmatpush1.msra.mxu0 %v1527
    %1529 = vmatprep.subr.mxu0 0.0
    %v1530 = vand.u32 %v754, 4294901760
    %v1531 = vsub.f32 %v754, %v1530
    %v1532 = vand.u32 %v1531, 4294901760
    %v1533 = vsub.f32 %v1531, %v1532
    %v1534 = vand.u32 %v1533, 4294901760
    %1535 = vmatpush1.msra.mxu0 %v1534
    %1536 = vmatprep.subr.mxu0 0.0
    %v1537 = vand.u32 %v755, 4294901760
    %v1538 = vsub.f32 %v755, %v1537
    %v1539 = vand.u32 %v1538, 4294901760
    %v1540 = vsub.f32 %v1538, %v1539
    %v1541 = vand.u32 %v1540, 4294901760
    %1542 = vmatpush1.msra.mxu0 %v1541
    %1543 = vmatprep.subr.mxu0 0.0
    %v1544 = vand.u32 %v756, 4294901760
    %v1545 = vsub.f32 %v756, %v1544
    %v1546 = vand.u32 %v1545, 4294901760
    %v1547 = vsub.f32 %v1545, %v1546
    %v1548 = vand.u32 %v1547, 4294901760
    %1549 = vmatpush1.msra.mxu0 %v1548
    %1550 = vmatprep.subr.mxu0 0.0
    %v1551 = vand.u32 %v757, 4294901760
    %v1552 = vsub.f32 %v757, %v1551
    %v1553 = vand.u32 %v1552, 4294901760
    %v1554 = vsub.f32 %v1552, %v1553
    %v1555 = vand.u32 %v1554, 4294901760
    %1556 = vmatpush1.msra.mxu0 %v1555
    %1557 = vmatprep.subr.mxu0 0.0
    %v1558 = vand.u32 %v758, 4294901760
    %v1559 = vsub.f32 %v758, %v1558
    %v1560 = vand.u32 %v1559, 4294901760
    %v1561 = vsub.f32 %v1559, %v1560
    %v1562 = vand.u32 %v1561, 4294901760
    %1563 = vmatpush1.msra.mxu0 %v1562
    %1564 = vmatprep.subr.mxu0 0.0
    %v1565 = vand.u32 %v759, 4294901760
    %v1566 = vsub.f32 %v759, %v1565
    %v1567 = vand.u32 %v1566, 4294901760
    %v1568 = vsub.f32 %v1566, %v1567
    %v1569 = vand.u32 %v1568, 4294901760
    %1570 = vmatpush1.msra.mxu0 %v1569
    %1571 = vmatprep.subr.mxu0 0.0
    %v1572 = vand.u32 %v760, 4294901760
    %v1573 = vsub.f32 %v760, %v1572
    %v1574 = vand.u32 %v1573, 4294901760
    %v1575 = vsub.f32 %v1573, %v1574
    %v1576 = vand.u32 %v1575, 4294901760
    %1577 = vmatpush1.msra.mxu0 %v1576
    %1578 = vmatprep.subr.mxu0 0.0
    %v1579 = vand.u32 %v761, 4294901760
    %v1580 = vsub.f32 %v761, %v1579
    %v1581 = vand.u32 %v1580, 4294901760
    %v1582 = vsub.f32 %v1580, %v1581
    %v1583 = vand.u32 %v1582, 4294901760
    %1584 = vmatpush1.msra.mxu0 %v1583
    %1585 = vmatprep.subr.mxu0 0.0
    %v1586 = vand.u32 %v762, 4294901760
    %v1587 = vsub.f32 %v762, %v1586
    %v1588 = vand.u32 %v1587, 4294901760
    %v1589 = vsub.f32 %v1587, %v1588
    %v1590 = vand.u32 %v1589, 4294901760
    %1591 = vmatpush1.msra.mxu0 %v1590
    %1592 = vmatprep.subr.mxu0 0.0
    %v1593 = vand.u32 %v763, 4294901760
    %v1594 = vsub.f32 %v763, %v1593
    %v1595 = vand.u32 %v1594, 4294901760
    %v1596 = vsub.f32 %v1594, %v1595
    %v1597 = vand.u32 %v1596, 4294901760
    %1598 = vmatpush1.msra.mxu0 %v1597
    %1599 = vmatprep.subr.mxu0 0.0
    %v1600 = vand.u32 %v764, 4294901760
    %v1601 = vsub.f32 %v764, %v1600
    %v1602 = vand.u32 %v1601, 4294901760
    %v1603 = vsub.f32 %v1601, %v1602
    %v1604 = vand.u32 %v1603, 4294901760
    %1605 = vmatpush1.msra.mxu0 %v1604
    %1606 = vmatprep.subr.mxu0 0.0
    %v1607 = vand.u32 %v765, 4294901760
    %v1608 = vsub.f32 %v765, %v1607
    %v1609 = vand.u32 %v1608, 4294901760
    %v1610 = vsub.f32 %v1608, %v1609
    %v1611 = vand.u32 %v1610, 4294901760
    %1612 = vmatpush1.msra.mxu0 %v1611
    %1613 = vmatprep.subr.mxu0 0.0
    %1614 = vmatpush1.msra.mxu0 0.0
    %1615 = vmatprep.subr.mxu0 0.0
    %1616 = vmatpush1.msra.mxu0 0.0
    %1617 = vmatprep.subr.mxu0 0.0
    %1618 = vmatpush1.msra.mxu0 0.0
    %1619 = vmatprep.subr.mxu0 0.0
    %1620 = vmatpush1.msra.mxu0 0.0
    %1621 = vmatprep.subr.mxu0 0.0
    %1622 = vmatpush1.msra.mxu0 0.0
    %1623 = vmatprep.subr.mxu0 0.0
    %1624 = vmatpush1.msra.mxu0 0.0
    %1625 = vmatprep.subr.mxu0 0.0
    %1626 = vmatpush1.msra.mxu0 0.0
    %1627 = vmatprep.subr.mxu0 0.0
    %1628 = vmatpush1.msra.mxu0 0.0
    %1629 = vmatprep.subr.mxu0 0.0
    %1630 = vmatpush1.msra.mxu0 0.0
    %1631 = vmatprep.subr.mxu0 0.0
    %1632 = vmatpush1.msra.mxu0 0.0
    %1633 = vmatprep.subr.mxu0 0.0
    %1634 = vmatpush1.msra.mxu0 0.0
    %1635 = vmatprep.subr.mxu0 0.0
    %1636 = vmatpush1.msra.mxu0 0.0
    %1637 = vmatprep.subr.mxu0 0.0
    %1638 = vmatpush1.msra.mxu0 0.0
    %1639 = vmatprep.subr.mxu0 0.0
    %1640 = vmatpush1.msra.mxu0 0.0
    %1641 = vmatprep.subr.mxu0 0.0
    %1642 = vmatpush1.msra.mxu0 0.0
    %1643 = vmatprep.subr.mxu0 0.0
    %1644 = vmatpush1.msra.mxu0 0.0
    %1645 = vmatprep.mubr.f32.mxu0 0.0
    %v1646 = vand.u32 %v1409, 4294901760
    %1647 = vmatmul.mubr.f32.gmra.mrb[0].mxu0 %v1646
    %v1648 = vpop.f32.mrb[0].mxu0
    %v1649 = vadd.f32 %v1498, %v1648
    %v1650 = vpop.f32.mrb[0].mxu0
    %1651 = vdwg.mxu0
    %1652 = vmatprep.subr.mxu0 0.0
    %v1653 = vand.u32 %v750, 4294901760
    %v1654 = vsub.f32 %v750, %v1653
    %1655 = vmatpush1.msra.mxu0 %v1654
    %1656 = vmatprep.subr.mxu0 0.0
    %v1657 = vand.u32 %v751, 4294901760
    %v1658 = vsub.f32 %v751, %v1657
    %1659 = vmatpush1.msra.mxu0 %v1658
    %1660 = vmatprep.subr.mxu0 0.0
    %v1661 = vand.u32 %v752, 4294901760
    %v1662 = vsub.f32 %v752, %v1661
    %1663 = vmatpush1.msra.mxu0 %v1662
    %1664 = vmatprep.subr.mxu0 0.0
    %v1665 = vand.u32 %v753, 4294901760
    %v1666 = vsub.f32 %v753, %v1665
    %1667 = vmatpush1.msra.mxu0 %v1666
    %1668 = vmatprep.subr.mxu0 0.0
    %v1669 = vand.u32 %v754, 4294901760
    %v1670 = vsub.f32 %v754, %v1669
    %1671 = vmatpush1.msra.mxu0 %v1670
    %1672 = vmatprep.subr.mxu0 0.0
    %v1673 = vand.u32 %v755, 4294901760
    %v1674 = vsub.f32 %v755, %v1673
    %1675 = vmatpush1.msra.mxu0 %v1674
    %1676 = vmatprep.subr.mxu0 0.0
    %v1677 = vand.u32 %v756, 4294901760
    %v1678 = vsub.f32 %v756, %v1677
    %1679 = vmatpush1.msra.mxu0 %v1678
    %1680 = vmatprep.subr.mxu0 0.0
    %v1681 = vand.u32 %v757, 4294901760
    %v1682 = vsub.f32 %v757, %v1681
    %1683 = vmatpush1.msra.mxu0 %v1682
    %1684 = vmatprep.subr.mxu0 0.0
    %v1685 = vand.u32 %v758, 4294901760
    %v1686 = vsub.f32 %v758, %v1685
    %1687 = vmatpush1.msra.mxu0 %v1686
    %1688 = vmatprep.subr.mxu0 0.0
    %v1689 = vand.u32 %v759, 4294901760
    %v1690 = vsub.f32 %v759, %v1689
    %1691 = vmatpush1.msra.mxu0 %v1690
    %1692 = vmatprep.subr.mxu0 0.0
    %v1693 = vand.u32 %v760, 4294901760
    %v1694 = vsub.f32 %v760, %v1693
    %1695 = vmatpush1.msra.mxu0 %v1694
    %1696 = vmatprep.subr.mxu0 0.0
    %v1697 = vand.u32 %v761, 4294901760
    %v1698 = vsub.f32 %v761, %v1697
    %1699 = vmatpush1.msra.mxu0 %v1698
    %1700 = vmatprep.subr.mxu0 0.0
    %v1701 = vand.u32 %v762, 4294901760
    %v1702 = vsub.f32 %v762, %v1701
    %1703 = vmatpush1.msra.mxu0 %v1702
    %1704 = vmatprep.subr.mxu0 0.0
    %v1705 = vand.u32 %v763, 4294901760
    %v1706 = vsub.f32 %v763, %v1705
    %1707 = vmatpush1.msra.mxu0 %v1706
    %1708 = vmatprep.subr.mxu0 0.0
    %v1709 = vand.u32 %v764, 4294901760
    %v1710 = vsub.f32 %v764, %v1709
    %1711 = vmatpush1.msra.mxu0 %v1710
    %1712 = vmatprep.subr.mxu0 0.0
    %v1713 = vand.u32 %v765, 4294901760
    %v1714 = vsub.f32 %v765, %v1713
    %1715 = vmatpush1.msra.mxu0 %v1714
    %1716 = vmatprep.subr.mxu0 0.0
    %1717 = vmatpush1.msra.mxu0 0.0
    %1718 = vmatprep.subr.mxu0 0.0
    %1719 = vmatpush1.msra.mxu0 0.0
    %1720 = vmatprep.subr.mxu0 0.0
    %1721 = vmatpush1.msra.mxu0 0.0
    %1722 = vmatprep.subr.mxu0 0.0
    %1723 = vmatpush1.msra.mxu0 0.0
    %1724 = vmatprep.subr.mxu0 0.0
    %1725 = vmatpush1.msra.mxu0 0.0
    %1726 = vmatprep.subr.mxu0 0.0
    %1727 = vmatpush1.msra.mxu0 0.0
    %1728 = vmatprep.subr.mxu0 0.0
    %1729 = vmatpush1.msra.mxu0 0.0
    %1730 = vmatprep.subr.mxu0 0.0
    %1731 = vmatpush1.msra.mxu0 0.0
    %1732 = vmatprep.subr.mxu0 0.0
    %1733 = vmatpush1.msra.mxu0 0.0
    %1734 = vmatprep.subr.mxu0 0.0
    %1735 = vmatpush1.msra.mxu0 0.0
    %1736 = vmatprep.subr.mxu0 0.0
    %1737 = vmatpush1.msra.mxu0 0.0
    %1738 = vmatprep.subr.mxu0 0.0
    %1739 = vmatpush1.msra.mxu0 0.0
    %1740 = vmatprep.subr.mxu0 0.0
    %1741 = vmatpush1.msra.mxu0 0.0
    %1742 = vmatprep.subr.mxu0 0.0
    %1743 = vmatpush1.msra.mxu0 0.0
    %1744 = vmatprep.subr.mxu0 0.0
    %1745 = vmatpush1.msra.mxu0 0.0
    %1746 = vmatprep.subr.mxu0 0.0
    %1747 = vmatpush1.msra.mxu0 0.0
    %1748 = vmatprep.mubr.f32.mxu0 0.0
    %v1749 = vand.u32 %v1409, 4294901760
    %v1750 = vsub.f32 %v1409, %v1749
    %1751 = vmatmul.mubr.f32.gmra.mrb[0].mxu0 %v1750
    %v1752 = vpop.f32.mrb[0].mxu0
    %v1753 = vadd.f32 %v1649, %v1752
    %v1754 = vpop.f32.mrb[0].mxu0
    %1755 = vdwg.mxu0
    %1756 = vmatprep.subr.mxu0 0.0
    %v1757 = vand.u32 %v750, 4294901760
    %1758 = vmatpush1.msra.mxu0 %v1757
    %1759 = vmatprep.subr.mxu0 0.0
    %v1760 = vand.u32 %v751, 4294901760
    %1761 = vmatpush1.msra.mxu0 %v1760
    %1762 = vmatprep.subr.mxu0 0.0
    %v1763 = vand.u32 %v752, 4294901760
    %1764 = vmatpush1.msra.mxu0 %v1763
    %1765 = vmatprep.subr.mxu0 0.0
    %v1766 = vand.u32 %v753, 4294901760
    %1767 = vmatpush1.msra.mxu0 %v1766
    %1768 = vmatprep.subr.mxu0 0.0
    %v1769 = vand.u32 %v754, 4294901760
    %1770 = vmatpush1.msra.mxu0 %v1769
    %1771 = vmatprep.subr.mxu0 0.0
    %v1772 = vand.u32 %v755, 4294901760
    %1773 = vmatpush1.msra.mxu0 %v1772
    %1774 = vmatprep.subr.mxu0 0.0
    %v1775 = vand.u32 %v756, 4294901760
    %1776 = vmatpush1.msra.mxu0 %v1775
    %1777 = vmatprep.subr.mxu0 0.0
    %v1778 = vand.u32 %v757, 4294901760
    %1779 = vmatpush1.msra.mxu0 %v1778
    %1780 = vmatprep.subr.mxu0 0.0
    %v1781 = vand.u32 %v758, 4294901760
    %1782 = vmatpush1.msra.mxu0 %v1781
    %1783 = vmatprep.subr.mxu0 0.0
    %v1784 = vand.u32 %v759, 4294901760
    %1785 = vmatpush1.msra.mxu0 %v1784
    %1786 = vmatprep.subr.mxu0 0.0
    %v1787 = vand.u32 %v760, 4294901760
    %1788 = vmatpush1.msra.mxu0 %v1787
    %1789 = vmatprep.subr.mxu0 0.0
    %v1790 = vand.u32 %v761, 4294901760
    %1791 = vmatpush1.msra.mxu0 %v1790
    %1792 = vmatprep.subr.mxu0 0.0
    %v1793 = vand.u32 %v762, 4294901760
    %1794 = vmatpush1.msra.mxu0 %v1793
    %1795 = vmatprep.subr.mxu0 0.0
    %v1796 = vand.u32 %v763, 4294901760
    %1797 = vmatpush1.msra.mxu0 %v1796
    %1798 = vmatprep.subr.mxu0 0.0
    %v1799 = vand.u32 %v764, 4294901760
    %1800 = vmatpush1.msra.mxu0 %v1799
    %1801 = vmatprep.subr.mxu0 0.0
    %v1802 = vand.u32 %v765, 4294901760
    %1803 = vmatpush1.msra.mxu0 %v1802
    %1804 = vmatprep.subr.mxu0 0.0
    %1805 = vmatpush1.msra.mxu0 0.0
    %1806 = vmatprep.subr.mxu0 0.0
    %1807 = vmatpush1.msra.mxu0 0.0
    %1808 = vmatprep.subr.mxu0 0.0
    %1809 = vmatpush1.msra.mxu0 0.0
    %1810 = vmatprep.subr.mxu0 0.0
    %1811 = vmatpush1.msra.mxu0 0.0
    %1812 = vmatprep.subr.mxu0 0.0
    %1813 = vmatpush1.msra.mxu0 0.0
    %1814 = vmatprep.subr.mxu0 0.0
    %1815 = vmatpush1.msra.mxu0 0.0
    %1816 = vmatprep.subr.mxu0 0.0
    %1817 = vmatpush1.msra.mxu0 0.0
    %1818 = vmatprep.subr.mxu0 0.0
    %1819 = vmatpush1.msra.mxu0 0.0
    %1820 = vmatprep.subr.mxu0 0.0
    %1821 = vmatpush1.msra.mxu0 0.0
    %1822 = vmatprep.subr.mxu0 0.0
    %1823 = vmatpush1.msra.mxu0 0.0
    %1824 = vmatprep.subr.mxu0 0.0
    %1825 = vmatpush1.msra.mxu0 0.0
    %1826 = vmatprep.subr.mxu0 0.0
    %1827 = vmatpush1.msra.mxu0 0.0
    %1828 = vmatprep.subr.mxu0 0.0
    %1829 = vmatpush1.msra.mxu0 0.0
    %1830 = vmatprep.subr.mxu0 0.0
    %1831 = vmatpush1.msra.mxu0 0.0
    %1832 = vmatprep.subr.mxu0 0.0
    %1833 = vmatpush1.msra.mxu0 0.0
    %1834 = vmatprep.subr.mxu0 0.0
    %1835 = vmatpush1.msra.mxu0 0.0
    %1836 = vmatprep.mubr.f32.mxu0 0.0
    %v1837 = vand.u32 %v1409, 4294901760
    %v1838 = vsub.f32 %v1409, %v1837
    %v1839 = vand.u32 %v1838, 4294901760
    %1840 = vmatmul.mubr.f32.gmra.mrb[0].mxu0 %v1839
    %v1841 = vpop.f32.mrb[0].mxu0
    %v1842 = vadd.f32 %v1753, %v1841
    %v1843 = vpop.f32.mrb[0].mxu0
    %1844 = vdwg.mxu0
    %1845 = vmatprep.subr.mxu0 0.0
    %v1846 = vand.u32 %v750, 4294901760
    %v1847 = vsub.f32 %v750, %v1846
    %v1848 = vand.u32 %v1847, 4294901760
    %1849 = vmatpush1.msra.mxu0 %v1848
    %1850 = vmatprep.subr.mxu0 0.0
    %v1851 = vand.u32 %v751, 4294901760
    %v1852 = vsub.f32 %v751, %v1851
    %v1853 = vand.u32 %v1852, 4294901760
    %1854 = vmatpush1.msra.mxu0 %v1853
    %1855 = vmatprep.subr.mxu0 0.0
    %v1856 = vand.u32 %v752, 4294901760
    %v1857 = vsub.f32 %v752, %v1856
    %v1858 = vand.u32 %v1857, 4294901760
    %1859 = vmatpush1.msra.mxu0 %v1858
    %1860 = vmatprep.subr.mxu0 0.0
    %v1861 = vand.u32 %v753, 4294901760
    %v1862 = vsub.f32 %v753, %v1861
    %v1863 = vand.u32 %v1862, 4294901760
    %1864 = vmatpush1.msra.mxu0 %v1863
    %1865 = vmatprep.subr.mxu0 0.0
    %v1866 = vand.u32 %v754, 4294901760
    %v1867 = vsub.f32 %v754, %v1866
    %v1868 = vand.u32 %v1867, 4294901760
    %1869 = vmatpush1.msra.mxu0 %v1868
    %1870 = vmatprep.subr.mxu0 0.0
    %v1871 = vand.u32 %v755, 4294901760
    %v1872 = vsub.f32 %v755, %v1871
    %v1873 = vand.u32 %v1872, 4294901760
    %1874 = vmatpush1.msra.mxu0 %v1873
    %1875 = vmatprep.subr.mxu0 0.0
    %v1876 = vand.u32 %v756, 4294901760
    %v1877 = vsub.f32 %v756, %v1876
    %v1878 = vand.u32 %v1877, 4294901760
    %1879 = vmatpush1.msra.mxu0 %v1878
    %1880 = vmatprep.subr.mxu0 0.0
    %v1881 = vand.u32 %v757, 4294901760
    %v1882 = vsub.f32 %v757, %v1881
    %v1883 = vand.u32 %v1882, 4294901760
    %1884 = vmatpush1.msra.mxu0 %v1883
    %1885 = vmatprep.subr.mxu0 0.0
    %v1886 = vand.u32 %v758, 4294901760
    %v1887 = vsub.f32 %v758, %v1886
    %v1888 = vand.u32 %v1887, 4294901760
    %1889 = vmatpush1.msra.mxu0 %v1888
    %1890 = vmatprep.subr.mxu0 0.0
    %v1891 = vand.u32 %v759, 4294901760
    %v1892 = vsub.f32 %v759, %v1891
    %v1893 = vand.u32 %v1892, 4294901760
    %1894 = vmatpush1.msra.mxu0 %v1893
    %1895 = vmatprep.subr.mxu0 0.0
    %v1896 = vand.u32 %v760, 4294901760
    %v1897 = vsub.f32 %v760, %v1896
    %v1898 = vand.u32 %v1897, 4294901760
    %1899 = vmatpush1.msra.mxu0 %v1898
    %1900 = vmatprep.subr.mxu0 0.0
    %v1901 = vand.u32 %v761, 4294901760
    %v1902 = vsub.f32 %v761, %v1901
    %v1903 = vand.u32 %v1902, 4294901760
    %1904 = vmatpush1.msra.mxu0 %v1903
    %1905 = vmatprep.subr.mxu0 0.0
    %v1906 = vand.u32 %v762, 4294901760
    %v1907 = vsub.f32 %v762, %v1906
    %v1908 = vand.u32 %v1907, 4294901760
    %1909 = vmatpush1.msra.mxu0 %v1908
    %1910 = vmatprep.subr.mxu0 0.0
    %v1911 = vand.u32 %v763, 4294901760
    %v1912 = vsub.f32 %v763, %v1911
    %v1913 = vand.u32 %v1912, 4294901760
    %1914 = vmatpush1.msra.mxu0 %v1913
    %1915 = vmatprep.subr.mxu0 0.0
    %v1916 = vand.u32 %v764, 4294901760
    %v1917 = vsub.f32 %v764, %v1916
    %v1918 = vand.u32 %v1917, 4294901760
    %1919 = vmatpush1.msra.mxu0 %v1918
    %1920 = vmatprep.subr.mxu0 0.0
    %v1921 = vand.u32 %v765, 4294901760
    %v1922 = vsub.f32 %v765, %v1921
    %v1923 = vand.u32 %v1922, 4294901760
    %1924 = vmatpush1.msra.mxu0 %v1923
    %1925 = vmatprep.subr.mxu0 0.0
    %1926 = vmatpush1.msra.mxu0 0.0
    %1927 = vmatprep.subr.mxu0 0.0
    %1928 = vmatpush1.msra.mxu0 0.0
    %1929 = vmatprep.subr.mxu0 0.0
    %1930 = vmatpush1.msra.mxu0 0.0
    %1931 = vmatprep.subr.mxu0 0.0
    %1932 = vmatpush1.msra.mxu0 0.0
    %1933 = vmatprep.subr.mxu0 0.0
    %1934 = vmatpush1.msra.mxu0 0.0
    %1935 = vmatprep.subr.mxu0 0.0
    %1936 = vmatpush1.msra.mxu0 0.0
    %1937 = vmatprep.subr.mxu0 0.0
    %1938 = vmatpush1.msra.mxu0 0.0
    %1939 = vmatprep.subr.mxu0 0.0
    %1940 = vmatpush1.msra.mxu0 0.0
    %1941 = vmatprep.subr.mxu0 0.0
    %1942 = vmatpush1.msra.mxu0 0.0
    %1943 = vmatprep.subr.mxu0 0.0
    %1944 = vmatpush1.msra.mxu0 0.0
    %1945 = vmatprep.subr.mxu0 0.0
    %1946 = vmatpush1.msra.mxu0 0.0
    %1947 = vmatprep.subr.mxu0 0.0
    %1948 = vmatpush1.msra.mxu0 0.0
    %1949 = vmatprep.subr.mxu0 0.0
    %1950 = vmatpush1.msra.mxu0 0.0
    %1951 = vmatprep.subr.mxu0 0.0
    %1952 = vmatpush1.msra.mxu0 0.0
    %1953 = vmatprep.subr.mxu0 0.0
    %1954 = vmatpush1.msra.mxu0 0.0
    %1955 = vmatprep.subr.mxu0 0.0
    %1956 = vmatpush1.msra.mxu0 0.0
    %1957 = vmatprep.mubr.f32.mxu0 0.0
    %v1958 = vand.u32 %v1409, 4294901760
    %1959 = vmatmul.mubr.f32.gmra.mrb[0].mxu0 %v1958
    %v1960 = vpop.f32.mrb[0].mxu0
    %v1961 = vadd.f32 %v1842, %v1960
    %v1962 = vpop.f32.mrb[0].mxu0
    %1963 = vdwg.mxu0
    %1964 = vmatprep.subr.mxu0 0.0
    %v1965 = vand.u32 %v750, 4294901760
    %1966 = vmatpush1.msra.mxu0 %v1965
    %1967 = vmatprep.subr.mxu0 0.0
    %v1968 = vand.u32 %v751, 4294901760
    %1969 = vmatpush1.msra.mxu0 %v1968
    %1970 = vmatprep.subr.mxu0 0.0
    %v1971 = vand.u32 %v752, 4294901760
    %1972 = vmatpush1.msra.mxu0 %v1971
    %1973 = vmatprep.subr.mxu0 0.0
    %v1974 = vand.u32 %v753, 4294901760
    %1975 = vmatpush1.msra.mxu0 %v1974
    %1976 = vmatprep.subr.mxu0 0.0
    %v1977 = vand.u32 %v754, 4294901760
    %1978 = vmatpush1.msra.mxu0 %v1977
    %1979 = vmatprep.subr.mxu0 0.0
    %v1980 = vand.u32 %v755, 4294901760
    %1981 = vmatpush1.msra.mxu0 %v1980
    %1982 = vmatprep.subr.mxu0 0.0
    %v1983 = vand.u32 %v756, 4294901760
    %1984 = vmatpush1.msra.mxu0 %v1983
    %1985 = vmatprep.subr.mxu0 0.0
    %v1986 = vand.u32 %v757, 4294901760
    %1987 = vmatpush1.msra.mxu0 %v1986
    %1988 = vmatprep.subr.mxu0 0.0
    %v1989 = vand.u32 %v758, 4294901760
    %1990 = vmatpush1.msra.mxu0 %v1989
    %1991 = vmatprep.subr.mxu0 0.0
    %v1992 = vand.u32 %v759, 4294901760
    %1993 = vmatpush1.msra.mxu0 %v1992
    %1994 = vmatprep.subr.mxu0 0.0
    %v1995 = vand.u32 %v760, 4294901760
    %1996 = vmatpush1.msra.mxu0 %v1995
    %1997 = vmatprep.subr.mxu0 0.0
    %v1998 = vand.u32 %v761, 4294901760
    %1999 = vmatpush1.msra.mxu0 %v1998
    %2000 = vmatprep.subr.mxu0 0.0
    %v2001 = vand.u32 %v762, 4294901760
    %2002 = vmatpush1.msra.mxu0 %v2001
    %2003 = vmatprep.subr.mxu0 0.0
    %v2004 = vand.u32 %v763, 4294901760
    %2005 = vmatpush1.msra.mxu0 %v2004
    %2006 = vmatprep.subr.mxu0 0.0
    %v2007 = vand.u32 %v764, 4294901760
    %2008 = vmatpush1.msra.mxu0 %v2007
    %2009 = vmatprep.subr.mxu0 0.0
    %v2010 = vand.u32 %v765, 4294901760
    %2011 = vmatpush1.msra.mxu0 %v2010
    %2012 = vmatprep.subr.mxu0 0.0
    %2013 = vmatpush1.msra.mxu0 0.0
    %2014 = vmatprep.subr.mxu0 0.0
    %2015 = vmatpush1.msra.mxu0 0.0
    %2016 = vmatprep.subr.mxu0 0.0
    %2017 = vmatpush1.msra.mxu0 0.0
    %2018 = vmatprep.subr.mxu0 0.0
    %2019 = vmatpush1.msra.mxu0 0.0
    %2020 = vmatprep.subr.mxu0 0.0
    %2021 = vmatpush1.msra.mxu0 0.0
    %2022 = vmatprep.subr.mxu0 0.0
    %2023 = vmatpush1.msra.mxu0 0.0
    %2024 = vmatprep.subr.mxu0 0.0
    %2025 = vmatpush1.msra.mxu0 0.0
    %2026 = vmatprep.subr.mxu0 0.0
    %2027 = vmatpush1.msra.mxu0 0.0
    %2028 = vmatprep.subr.mxu0 0.0
    %2029 = vmatpush1.msra.mxu0 0.0
    %2030 = vmatprep.subr.mxu0 0.0
    %2031 = vmatpush1.msra.mxu0 0.0
    %2032 = vmatprep.subr.mxu0 0.0
    %2033 = vmatpush1.msra.mxu0 0.0
    %2034 = vmatprep.subr.mxu0 0.0
    %2035 = vmatpush1.msra.mxu0 0.0
    %2036 = vmatprep.subr.mxu0 0.0
    %2037 = vmatpush1.msra.mxu0 0.0
    %2038 = vmatprep.subr.mxu0 0.0
    %2039 = vmatpush1.msra.mxu0 0.0
    %2040 = vmatprep.subr.mxu0 0.0
    %2041 = vmatpush1.msra.mxu0 0.0
    %2042 = vmatprep.subr.mxu0 0.0
    %2043 = vmatpush1.msra.mxu0 0.0
    %2044 = vmatprep.mubr.f32.mxu0 0.0
    %v2045 = vand.u32 %v1409, 4294901760
    %2046 = vmatmul.mubr.f32.gmra.mrb[0].mxu0 %v2045
    %v2047 = vpop.f32.mrb[0].mxu0
    %v2048 = vadd.f32 %v1961, %v2047
    %v2049 = vpop.f32.mrb[0].mxu0
    %2050 = vdwg.mxu0
    %v2051 = vmul.f32 %v2048, 0.03125
    %v2052 = vadd.f32 %v2051, 1e-05
    %v2053 = vrsqrt.pop %v2052
    %v2054 = vmul.f32 %v1408, %v2053
    %v2055 = vlaneseq
    %v2056 = vshrl.u32 %v2055, 7
    %v2057 = vsub.s32 1, %v2056
    %v2058 = vrot.slane %v743, %v2057
    %v2059 = vmul.f32 %v2054, %v2058
    %v2060 = vlaneseq
    %v2061 = vshrl.u32 %v2060, 7
    %v2062 = vsub.s32 2, %v2061
    %v2063 = vrot.slane %v743, %v2062
    %v2064 = vadd.f32 %v2059, %v2063
    %2065 = vst [vmem:[#allocation10] sm:$0xff] %v2064
    // Predicated region
    $region38: #{tpu_custom_call.1} parent=1 // pred_check
      _
    $region39: #{tpu_custom_call.1} parent=1 // pred_check_branch
      %2067 = sbr.rel (0) target = $region41
    $region40: #{tpu_custom_call.1} parent=1 // pred_region
      %s2069 = ssub.s32 128, 128
      %2070 = vsyncadd [#allocation4], %s2069
      %s2072 = sshll.u32 [#allocation10], 4
      %s2073 = int_to_ptr.vmem [resolvable:$true] %s2072
      %2075 = dma.vmem_to_hbm [thread:$0]  %s2073, 128, %s5, [#allocation4]
    $region41: #{tpu_custom_call.1} parent=1 // pred_fallthru
      _
    // Predicated region
    $region42: #{tpu_custom_call.1} parent=1 // pred_check
      _
    $region43: #{tpu_custom_call.1} parent=1 // pred_check_branch
      %2077 = sbr.rel (0) target = $region45
    $region44: #{tpu_custom_call.1} parent=1 // pred_region
      %2078 = dma.done [#allocation4], 128
    $region45: #{tpu_custom_call.1} parent=1 // pred_fallthru
      _
    %2079 = vsyncpa [#allocation3], 1
    %2080 = vsyncpa [#allocation6], 1
    %2081 = vsyncpa [#allocation9], 1
    %2082 = vsyncpa [#allocation4], 1

</llo_original>
